<compile_context>
chip_gen: v7x
topology: tpu7x:2x2x1
jax: 0.10.0
libtpu: 0.0.40
codegen_flags: <defaults>
</compile_context>

<pallas_src>
import math
import jax
import jax.numpy as jnp
from jax.experimental import pallas as pl
from jax.experimental.pallas import tpu as pltpu


# --------------------------- fused multi-layer kernel -------------------------
def _make_fused_kernel(L, T, B, I, H, compute_dtype, unroll):
    four_h = 4 * H

    def kernel(*refs):
        # refs = [x, (w_ih, w_hh, b) * L, w_out, b_out, y, xw_scr, h_slab, h_c, c_c]
        n_in = 1 + 3 * L + 2
        x_ref = refs[0]
        layer_refs = [refs[1 + 3 * l: 1 + 3 * (l + 1)] for l in range(L)]
        w_out_ref = refs[1 + 3 * L]
        b_out_ref = refs[2 + 3 * L]
        y_ref = refs[n_in]
        xw_scr, h_slab, h_carry, c_carry = refs[n_in + 1:]

        @pl.when(pl.program_id(0) == 0)
        def _():
            h_carry[...] = jnp.zeros_like(h_carry)
            c_carry[...] = jnp.zeros_like(c_carry)

        for l in range(L):
            w_ih_ref, w_hh_ref, b_ref = layer_refs[l]

            # (1) Hoisted input projection for the whole block: one MXU matmul.
            #     Layer 0 reads the pipelined input block; layers >0 read the
            #     previous layer's hidden slab straight from VMEM.
            if l == 0:
                x_in = x_ref[...].reshape(T * B, I).astype(compute_dtype)
            else:
                x_in = h_slab[...].reshape(T * B, H).astype(compute_dtype)
            xw = jnp.dot(x_in, w_ih_ref[...],
                         preferred_element_type=jnp.float32)
            xw_scr[...] = (xw + b_ref[...]).reshape(T, B, four_h).astype(
                xw_scr.dtype)

            w_hh = w_hh_ref[...]  # VMEM-resident recurrent weights

            def step(t, carry, w_hh=w_hh):
                h_prev, c_prev = carry
                # Only the recurrent matmul remains on the serial critical path.
                gates = (xw_scr[t].astype(jnp.float32)
                         + jnp.dot(h_prev.astype(compute_dtype), w_hh,
                                   preferred_element_type=jnp.float32))
                # PyTorch gate order [i, f, g, o]; lane-aligned when H % 128 == 0.
                i_g = jax.nn.sigmoid(gates[:, 0:H])
                f_g = jax.nn.sigmoid(gates[:, H:2 * H])
                g_g = jnp.tanh(gates[:, 2 * H:3 * H])
                o_g = jax.nn.sigmoid(gates[:, 3 * H:4 * H])
                c_new = f_g * c_prev + i_g * g_g
                h_new = o_g * jnp.tanh(c_new)
                # Safe to overwrite h_slab[t]: xw_scr already captured layer
                # l-1's activations for the whole block.
                h_slab[t] = h_new.astype(h_slab.dtype)
                return (h_new, c_new)

            h_last, c_last = jax.lax.fori_loop(
                0, T, step, (h_carry[l], c_carry[l]), unroll=unroll)
            h_carry[l] = h_last
            c_carry[l] = c_last

        # Fused Linear head: one (T*B, H) @ (H, 1) matmul per seq block,
        # emitted as a dense (T, B) slab (no last-dim-1 masked stores).
        h_all = h_slab[...].reshape(T * B, H).astype(compute_dtype)
        y = jnp.dot(h_all, w_out_ref[...], preferred_element_type=jnp.float32)
        y_ref[0] = (y + b_out_ref[...]).reshape(T, B)

    return kernel


# ------------------------------ VMEM budgeting --------------------------------
def _vmem_capacity_bytes():
    try:
        return int(pltpu.get_tpu_info().vmem_capacity_bytes)
    except Exception:
        return 64 * 1024 * 1024  # conservative (v7x per-TC) fallback


def _vmem_need_bytes(t_blk, B, I, H, L, c_bytes, s_bytes):
    four_h = 4 * H
    # Weights (budget 2 copies in case the pipeline keeps a second buffer
    # despite the constant index_map), biases f32, head in compute dtype.
    w = (I + (L - 1) * H) * four_h * c_bytes      # all W_ih
    w += L * H * four_h * c_bytes                 # all W_hh
    w += L * four_h * 4                           # fused biases (f32)
    w += (H + 1) * c_bytes + 4                    # head
    weights = 2 * w
    x_blk = 2 * t_blk * B * I * c_bytes           # double-buffered input block
    y_blk = 2 * t_blk * B * 4                     # double-buffered output block
    xw = t_blk * B * four_h * s_bytes             # hoisted projection scratch
    h_slab = t_blk * B * H * s_bytes              # hidden slab scratch
    carries = 2 * L * B * H * 4                   # f32 h/c carries
    return weights + x_blk + y_blk + xw + h_slab + carries


# ------------------------------ forward wrapper --------------------------------
def rnn_forward(x, params, *, t_blk=None, compute_dtype=jnp.float32):
    """x: (S, B, I) f32 -> (S, B, 1) f32, matching the PyTorch RNN module."""
    S, B, I = x.shape
    layers = params["lstm"]
    L = len(layers)
    H = layers[0][1].shape[0]

    # Pad batch to a sublane multiple so in-kernel reshapes are layout-free.
    mult = 8 if jnp.dtype(compute_dtype).itemsize == 4 else 16
    B_pad = -(-B // mult) * mult
    if B_pad != B:
        x = jnp.pad(x, ((0, 0), (0, B_pad - B), (0, 0)))

    scratch_dtype = compute_dtype  # bf16 scratch in bf16 mode halves VMEM use
    c_bytes = jnp.dtype(compute_dtype).itemsize
    s_bytes = jnp.dtype(scratch_dtype).itemsize

    cap = _vmem_capacity_bytes()
    budget = int(cap * 0.85)

    if t_blk is None or t_blk <= 0 or S % t_blk != 0:
        # TODO(synk): pad S instead of requiring a divisor for very long,
        # prime-length sequences.
        divisors = [d for d in range(S, 0, -1) if S % d == 0]
        t_blk = next(
            (d for d in divisors
             if _vmem_need_bytes(d, B_pad, I, H, L, c_bytes, s_bytes) <= budget),
            divisors[-1])
    n_blk = S // t_blk
    unroll = max(1, min(t_blk, 8))  # partial unroll: overlap w/o vreg blowup

    need = _vmem_need_bytes(t_blk, B_pad, I, H, L, c_bytes, s_bytes)
    vmem_limit = int(min(cap, max(need + (4 << 20), 32 << 20)))

    kernel = _make_fused_kernel(L, t_blk, B_pad, I, H, compute_dtype, unroll)

    in_specs = [pl.BlockSpec((t_blk, B_pad, I), lambda i: (i, 0, 0))]
    args = [x.astype(compute_dtype)]
    for (w_ih_t, w_hh_t, b) in layers:
        in_sz = w_ih_t.shape[0]
        in_specs += [
            pl.BlockSpec((in_sz, 4 * H), lambda i: (0, 0)),  # constant index ->
            pl.BlockSpec((H, 4 * H), lambda i: (0, 0)),      # DMA'd once,
            pl.BlockSpec((1, 4 * H), lambda i: (0, 0)),      # VMEM-resident
        ]
        args += [w_ih_t.astype(compute_dtype), w_hh_t.astype(compute_dtype), b]
    in_specs += [pl.BlockSpec((H, 1), lambda i: (0, 0)),
                 pl.BlockSpec((1, 1), lambda i: (0, 0))]
    args += [params["out_w_t"].astype(compute_dtype), params["out_b"]]

    out_shape = jax.ShapeDtypeStruct((n_blk, t_blk, B_pad), jnp.float32)
    out_specs = pl.BlockSpec((1, t_blk, B_pad), lambda i: (i, 0, 0))

    scratch = [
        pltpu.VMEM((t_blk, B_pad, 4 * H), scratch_dtype),  # hoisted projection
        pltpu.VMEM((t_blk, B_pad, H), scratch_dtype),      # hidden slab
        pltpu.VMEM((L, B_pad, H), jnp.float32),            # h carry (per layer)
        pltpu.VMEM((L, B_pad, H), jnp.float32),            # c carry (per layer)
    ]

    y = pl.pallas_call(
        kernel,
        out_shape=out_shape,
        grid_spec=pltpu.PrefetchScalarGridSpec(
            num_scalar_prefetch=0,
            grid=(n_blk,),
            in_specs=in_specs,
            out_specs=out_specs,
            scratch_shapes=scratch,
        ),
        compiler_params=pltpu.CompilerParams(
            dimension_semantics=("arbitrary",),  # sequential carry over blocks
            vmem_limit_bytes=vmem_limit),
    )(*args)

    return y.reshape(S, B_pad)[:, :B].reshape(S, B, 1)


# ------------------------------ module glue ----------------------------------
def init_params(key, input_size, hidden_size, num_layers):
    k_lstm = 1.0 / math.sqrt(hidden_size)
    layers = []
    in_sz = input_size
    for _ in range(num_layers):
        key, k1, k2, k3, k4 = jax.random.split(key, 5)
        # PyTorch stores weight_ih as (4H, in), weight_hh as (4H, H); we keep
        # the transposed layouts so kernels do x @ W directly. b = b_ih + b_hh.
        w_ih_t = jax.random.uniform(k1, (in_sz, 4 * hidden_size),
                                    minval=-k_lstm, maxval=k_lstm, dtype=jnp.float32)
        w_hh_t = jax.random.uniform(k2, (hidden_size, 4 * hidden_size),
                                    minval=-k_lstm, maxval=k_lstm, dtype=jnp.float32)
        b_ih = jax.random.uniform(k3, (4 * hidden_size,),
                                  minval=-k_lstm, maxval=k_lstm, dtype=jnp.float32)
        b_hh = jax.random.uniform(k4, (4 * hidden_size,),
                                  minval=-k_lstm, maxval=k_lstm, dtype=jnp.float32)
        layers.append((w_ih_t, w_hh_t, (b_ih + b_hh)[None, :]))
        in_sz = hidden_size
    k_out = 1.0 / math.sqrt(hidden_size)
    key, k5, k6 = jax.random.split(key, 3)
    out_w_t = jax.random.uniform(k5, (hidden_size, 1),
                                 minval=-k_out, maxval=k_out, dtype=jnp.float32)
    out_b = jax.random.uniform(k6, (1, 1),
                               minval=-k_out, maxval=k_out, dtype=jnp.float32)
    return {"lstm": layers, "out_w_t": out_w_t, "out_b": out_b}


# ------------------- pure-JAX reference (lax.scan, f32) -----------------------
def reference_forward(x, params):
    h = x
    for (w_ih_t, w_hh_t, b) in params["lstm"]:
        H = w_hh_t.shape[0]
        B = h.shape[1]

        def step(carry, x_t, w_ih_t=w_ih_t, w_hh_t=w_hh_t, b=b, H=H):
            h_prev, c_prev = carry
            gates = x_t @ w_ih_t + h_prev @ w_hh_t + b
            i_g = jax.nn.sigmoid(gates[:, 0:H])
            f_g = jax.nn.sigmoid(gates[:, H:2 * H])
            g_g = jnp.tanh(gates[:, 2 * H:3 * H])
            o_g = jax.nn.sigmoid(gates[:, 3 * H:4 * H])
            c = f_g * c_prev + i_g * g_g
            hh = o_g * jnp.tanh(c)
            return (hh, c), hh

        init = (jnp.zeros((B, H), jnp.float32), jnp.zeros((B, H), jnp.float32))
        _, h = jax.lax.scan(step, init, h)
    S, B, H = h.shape
    y = h.reshape(S * B, H) @ params["out_w_t"] + params["out_b"][0, 0]
    return y.reshape(S, B, 1)


if __name__ == "__main__":
    input_size, hidden_size, num_layers = 16, 32, 2
    seq, batch = 8, 2

    key = jax.random.PRNGKey(0)
    key, xk = jax.random.split(key)
    x = jax.random.normal(xk, (seq, batch, input_size), dtype=jnp.float32)

    params = init_params(key, input_size, hidden_size, num_layers)

    # f32 path (exact semantics of the PyTorch module); t_blk=4 -> 2 seq blocks,
    # exercising the per-layer VMEM h/c carries across grid steps.
    y = rnn_forward(x, params, t_blk=4)
    y = jax.block_until_ready(y)

    y_ref = reference_forward(x, params)
    assert y.shape == (seq, batch, 1), y.shape
    assert jnp.allclose(y, y_ref, atol=1e-5, rtol=1e-5), \
        float(jnp.max(jnp.abs(y - y_ref)))

    # Auto block-size path (t_blk derived from the VMEM budget).
    y_auto = jax.block_until_ready(rnn_forward(x, params))
    assert jnp.allclose(y_auto, y_ref, atol=1e-5, rtol=1e-5)

    # bf16-matmul path (MXU-native operands + bf16 scratch, f32 accumulation
    # and carries) — loose check.
    y_bf16 = jax.block_until_ready(
        rnn_forward(x, params, t_blk=4, compute_dtype=jnp.bfloat16))
    assert y_bf16.shape == (seq, batch, 1)
    assert float(jnp.max(jnp.abs(y_bf16.astype(jnp.float32) - y_ref))) < 0.25

    print("KERNEL_OK")
</pallas_src>

<mosaic_0001>
module attributes {stable_mosaic.version = 11 : i64} {
  func.func @kernel(%arg0: i32, %arg1: memref<4x8x16xf32, #tpu.memory_space<vmem>>, %arg2: memref<16x128xf32, #tpu.memory_space<vmem>>, %arg3: memref<32x128xf32, #tpu.memory_space<vmem>>, %arg4: memref<1x128xf32, #tpu.memory_space<vmem>>, %arg5: memref<32x128xf32, #tpu.memory_space<vmem>>, %arg6: memref<32x128xf32, #tpu.memory_space<vmem>>, %arg7: memref<1x128xf32, #tpu.memory_space<vmem>>, %arg8: memref<32x1xf32, #tpu.memory_space<vmem>>, %arg9: memref<1x1xf32, #tpu.memory_space<vmem>>, %arg10: memref<1x4x8xf32, #tpu.memory_space<vmem>>, %arg11: memref<4x8x128xf32, #tpu.memory_space<vmem>>, %arg12: memref<4x8x32xf32, #tpu.memory_space<vmem>>, %arg13: memref<2x8x32xf32, #tpu.memory_space<vmem>>, %arg14: memref<2x8x32xf32, #tpu.memory_space<vmem>>) attributes {dimension_semantics = [#tpu.dimension_semantics<arbitrary>], iteration_bounds = array<i64: 2>, scalar_prefetch = 0 : i64, scratch_operands = 4 : i64, tpu.core_type = #tpu.core_type<tc>, window_params = [{transform_indices = @transform_0, window_bounds = array<i64: 4, 8, 16>}, {pipeline_mode = #tpu.pipeline_mode<synchronous>, transform_indices = @transform_1, window_bounds = array<i64: 16, 128>}, {pipeline_mode = #tpu.pipeline_mode<synchronous>, transform_indices = @transform_2, window_bounds = array<i64: 32, 128>}, {pipeline_mode = #tpu.pipeline_mode<synchronous>, transform_indices = @transform_3, window_bounds = array<i64: 1, 128>}, {pipeline_mode = #tpu.pipeline_mode<synchronous>, transform_indices = @transform_4, window_bounds = array<i64: 32, 128>}, {pipeline_mode = #tpu.pipeline_mode<synchronous>, transform_indices = @transform_5, window_bounds = array<i64: 32, 128>}, {pipeline_mode = #tpu.pipeline_mode<synchronous>, transform_indices = @transform_6, window_bounds = array<i64: 1, 128>}, {pipeline_mode = #tpu.pipeline_mode<synchronous>, transform_indices = @transform_7, window_bounds = array<i64: 32, 1>}, {pipeline_mode = #tpu.pipeline_mode<synchronous>, transform_indices = @transform_8, window_bounds = array<i64: 1, 1>}, {transform_indices = @transform_9, window_bounds = array<i64: 1, 4, 8>}]} {
    %c0_i32 = arith.constant 0 : i32
    %0 = arith.cmpi eq, %arg0, %c0_i32 : i32
    %1 = arith.extui %0 : i1 to i32
    %c0_i32_0 = arith.constant 0 : i32
    %2 = arith.cmpi ne, %1, %c0_i32_0 : i32
    scf.if %2 {
      %cst_129 = arith.constant 0.000000e+00 : f32
      %326 = vector.broadcast %cst_129 : f32 to vector<2x8x32xf32>
      %c0_130 = arith.constant 0 : index
      %c0_131 = arith.constant 0 : index
      %c0_132 = arith.constant 0 : index
      %327 = vector.load %arg13[%c0_130, %c0_131, %c0_132] : memref<2x8x32xf32, #tpu.memory_space<vmem>>, vector<2x8x32xf32>
      tpu.vector_store %arg13[%c0_130, %c0_131, %c0_132], %326 {strides = array<i32>} : memref<2x8x32xf32, #tpu.memory_space<vmem>>, vector<2x8x32xf32>,
      %cst_133 = arith.constant 0.000000e+00 : f32
      %328 = vector.broadcast %cst_133 : f32 to vector<2x8x32xf32>
      %c0_134 = arith.constant 0 : index
      %c0_135 = arith.constant 0 : index
      %c0_136 = arith.constant 0 : index
      %329 = vector.load %arg14[%c0_134, %c0_135, %c0_136] : memref<2x8x32xf32, #tpu.memory_space<vmem>>, vector<2x8x32xf32>
      tpu.vector_store %arg14[%c0_134, %c0_135, %c0_136], %328 {strides = array<i32>} : memref<2x8x32xf32, #tpu.memory_space<vmem>>, vector<2x8x32xf32>,
    } else {
    }
    %c0 = arith.constant 0 : index
    %c0_1 = arith.constant 0 : index
    %c0_2 = arith.constant 0 : index
    %3 = vector.load %arg1[%c0, %c0_1, %c0_2] : memref<4x8x16xf32, #tpu.memory_space<vmem>>, vector<4x8x16xf32>
    %4 = vector.shape_cast %3 : vector<4x8x16xf32> to vector<32x16xf32>
    %c0_3 = arith.constant 0 : index
    %c0_4 = arith.constant 0 : index
    %5 = vector.load %arg2[%c0_3, %c0_4] : memref<16x128xf32, #tpu.memory_space<vmem>>, vector<16x128xf32>
    %cst = arith.constant dense<0.000000e+00> : vector<32x128xf32>
    %6 = tpu.matmul %4, %5, %cst {dimension_numbers = #tpu.dot_dimension_numbers<[1], [0], [0], [1], [0, 0, 1, 1], [], []>} : vector<32x16xf32>, vector<16x128xf32>, vector<32x128xf32> -> vector<32x128xf32>
    %c0_5 = arith.constant 0 : index
    %c0_6 = arith.constant 0 : index
    %7 = vector.load %arg4[%c0_5, %c0_6] : memref<1x128xf32, #tpu.memory_space<vmem>>, vector<1x128xf32>
    %8 = vector.broadcast %7 : vector<1x128xf32> to vector<32x128xf32>
    %9 = arith.addf %6, %8 : vector<32x128xf32>
    %10 = vector.shape_cast %9 : vector<32x128xf32> to vector<4x8x128xf32>
    %c0_7 = arith.constant 0 : index
    %c0_8 = arith.constant 0 : index
    %c0_9 = arith.constant 0 : index
    %11 = vector.load %arg11[%c0_7, %c0_8, %c0_9] : memref<4x8x128xf32, #tpu.memory_space<vmem>>, vector<4x8x128xf32>
    tpu.vector_store %arg11[%c0_7, %c0_8, %c0_9], %10 {strides = array<i32>} : memref<4x8x128xf32, #tpu.memory_space<vmem>>, vector<4x8x128xf32>,
    %c0_10 = arith.constant 0 : index
    %c0_11 = arith.constant 0 : index
    %12 = vector.load %arg3[%c0_10, %c0_11] : memref<32x128xf32, #tpu.memory_space<vmem>>, vector<32x128xf32>
    %c0_12 = arith.constant 0 : index
    %c0_13 = arith.constant 0 : index
    %c0_14 = arith.constant 0 : index
    %13 = vector.load %arg13[%c0_12, %c0_13, %c0_14] : memref<2x8x32xf32, #tpu.memory_space<vmem>>, vector<1x8x32xf32>
    %14 = vector.shape_cast %13 : vector<1x8x32xf32> to vector<8x32xf32>
    %c0_15 = arith.constant 0 : index
    %c0_16 = arith.constant 0 : index
    %c0_17 = arith.constant 0 : index
    %15 = vector.load %arg14[%c0_15, %c0_16, %c0_17] : memref<2x8x32xf32, #tpu.memory_space<vmem>>, vector<1x8x32xf32>
    %16 = vector.shape_cast %15 : vector<1x8x32xf32> to vector<8x32xf32>
    %c0_i32_18 = arith.constant 0 : i32
    %17 = arith.index_cast %c0_i32_18 : i32 to index
    %c0_19 = arith.constant 0 : index
    %c0_20 = arith.constant 0 : index
    %18 = vector.load %arg11[%17, %c0_19, %c0_20] : memref<4x8x128xf32, #tpu.memory_space<vmem>>, vector<1x8x128xf32>
    %19 = vector.shape_cast %18 : vector<1x8x128xf32> to vector<8x128xf32>
    %cst_21 = arith.constant dense<0.000000e+00> : vector<8x128xf32>
    %20 = tpu.matmul %14, %12, %cst_21 {dimension_numbers = #tpu.dot_dimension_numbers<[1], [0], [0], [1], [0, 0, 1, 1], [], []>} : vector<8x32xf32>, vector<32x128xf32>, vector<8x128xf32> -> vector<8x128xf32>
    %21 = arith.addf %19, %20 : vector<8x128xf32>
    %22 = vector.extract_strided_slice %21 {offsets = [0, 0], sizes = [8, 32], strides = [1, 1]} : vector<8x128xf32> to vector<8x32xf32>
    %23 = arith.negf %22 : vector<8x32xf32>
    %24 = math.exp %23 : vector<8x32xf32>
    %cst_22 = arith.constant 1.000000e+00 : f32
    %25 = vector.broadcast %cst_22 : f32 to vector<8x32xf32>
    %26 = arith.addf %25, %24 : vector<8x32xf32>
    %27 = arith.divf %25, %26 : vector<8x32xf32>
    %28 = vector.extract_strided_slice %21 {offsets = [0, 32], sizes = [8, 32], strides = [1, 1]} : vector<8x128xf32> to vector<8x32xf32>
    %29 = arith.negf %28 : vector<8x32xf32>
    %30 = math.exp %29 : vector<8x32xf32>
    %cst_23 = arith.constant 1.000000e+00 : f32
    %31 = vector.broadcast %cst_23 : f32 to vector<8x32xf32>
    %32 = arith.addf %31, %30 : vector<8x32xf32>
    %33 = arith.divf %31, %32 : vector<8x32xf32>
    %34 = vector.extract_strided_slice %21 {offsets = [0, 64], sizes = [8, 32], strides = [1, 1]} : vector<8x128xf32> to vector<8x32xf32>
    %35 = math.tanh %34 : vector<8x32xf32>
    %36 = vector.extract_strided_slice %21 {offsets = [0, 96], sizes = [8, 32], strides = [1, 1]} : vector<8x128xf32> to vector<8x32xf32>
    %37 = arith.negf %36 : vector<8x32xf32>
    %38 = math.exp %37 : vector<8x32xf32>
    %cst_24 = arith.constant 1.000000e+00 : f32
    %39 = vector.broadcast %cst_24 : f32 to vector<8x32xf32>
    %40 = arith.addf %39, %38 : vector<8x32xf32>
    %41 = arith.divf %39, %40 : vector<8x32xf32>
    %42 = arith.mulf %33, %16 : vector<8x32xf32>
    %43 = arith.mulf %27, %35 : vector<8x32xf32>
    %44 = arith.addf %42, %43 : vector<8x32xf32>
    %45 = math.tanh %44 : vector<8x32xf32>
    %46 = arith.mulf %41, %45 : vector<8x32xf32>
    %47 = arith.index_cast %c0_i32_18 : i32 to index
    %c0_25 = arith.constant 0 : index
    %c0_26 = arith.constant 0 : index
    %48 = vector.load %arg12[%47, %c0_25, %c0_26] : memref<4x8x32xf32, #tpu.memory_space<vmem>>, vector<1x8x32xf32>
    %49 = vector.shape_cast %48 : vector<1x8x32xf32> to vector<8x32xf32>
    %50 = vector.shape_cast %46 : vector<8x32xf32> to vector<1x8x32xf32>
    tpu.vector_store %arg12[%47, %c0_25, %c0_26], %50 {strides = array<i32>} : memref<4x8x32xf32, #tpu.memory_space<vmem>>, vector<1x8x32xf32>,
    %c1_i32 = arith.constant 1 : i32
    %51 = arith.index_cast %c1_i32 : i32 to index
    %c0_27 = arith.constant 0 : index
    %c0_28 = arith.constant 0 : index
    %52 = vector.load %arg11[%51, %c0_27, %c0_28] : memref<4x8x128xf32, #tpu.memory_space<vmem>>, vector<1x8x128xf32>
    %53 = vector.shape_cast %52 : vector<1x8x128xf32> to vector<8x128xf32>
    %cst_29 = arith.constant dense<0.000000e+00> : vector<8x128xf32>
    %54 = tpu.matmul %46, %12, %cst_29 {dimension_numbers = #tpu.dot_dimension_numbers<[1], [0], [0], [1], [0, 0, 1, 1], [], []>} : vector<8x32xf32>, vector<32x128xf32>, vector<8x128xf32> -> vector<8x128xf32>
    %55 = arith.addf %53, %54 : vector<8x128xf32>
    %56 = vector.extract_strided_slice %55 {offsets = [0, 0], sizes = [8, 32], strides = [1, 1]} : vector<8x128xf32> to vector<8x32xf32>
    %57 = arith.negf %56 : vector<8x32xf32>
    %58 = math.exp %57 : vector<8x32xf32>
    %cst_30 = arith.constant 1.000000e+00 : f32
    %59 = vector.broadcast %cst_30 : f32 to vector<8x32xf32>
    %60 = arith.addf %59, %58 : vector<8x32xf32>
    %61 = arith.divf %59, %60 : vector<8x32xf32>
    %62 = vector.extract_strided_slice %55 {offsets = [0, 32], sizes = [8, 32], strides = [1, 1]} : vector<8x128xf32> to vector<8x32xf32>
    %63 = arith.negf %62 : vector<8x32xf32>
    %64 = math.exp %63 : vector<8x32xf32>
    %cst_31 = arith.constant 1.000000e+00 : f32
    %65 = vector.broadcast %cst_31 : f32 to vector<8x32xf32>
    %66 = arith.addf %65, %64 : vector<8x32xf32>
    %67 = arith.divf %65, %66 : vector<8x32xf32>
    %68 = vector.extract_strided_slice %55 {offsets = [0, 64], sizes = [8, 32], strides = [1, 1]} : vector<8x128xf32> to vector<8x32xf32>
    %69 = math.tanh %68 : vector<8x32xf32>
    %70 = vector.extract_strided_slice %55 {offsets = [0, 96], sizes = [8, 32], strides = [1, 1]} : vector<8x128xf32> to vector<8x32xf32>
    %71 = arith.negf %70 : vector<8x32xf32>
    %72 = math.exp %71 : vector<8x32xf32>
    %cst_32 = arith.constant 1.000000e+00 : f32
    %73 = vector.broadcast %cst_32 : f32 to vector<8x32xf32>
    %74 = arith.addf %73, %72 : vector<8x32xf32>
    %75 = arith.divf %73, %74 : vector<8x32xf32>
    %76 = arith.mulf %67, %44 : vector<8x32xf32>
    %77 = arith.mulf %61, %69 : vector<8x32xf32>
    %78 = arith.addf %76, %77 : vector<8x32xf32>
    %79 = math.tanh %78 : vector<8x32xf32>
    %80 = arith.mulf %75, %79 : vector<8x32xf32>
    %81 = arith.index_cast %c1_i32 : i32 to index
    %c0_33 = arith.constant 0 : index
    %c0_34 = arith.constant 0 : index
    %82 = vector.load %arg12[%81, %c0_33, %c0_34] : memref<4x8x32xf32, #tpu.memory_space<vmem>>, vector<1x8x32xf32>
    %83 = vector.shape_cast %82 : vector<1x8x32xf32> to vector<8x32xf32>
    %84 = vector.shape_cast %80 : vector<8x32xf32> to vector<1x8x32xf32>
    tpu.vector_store %arg12[%81, %c0_33, %c0_34], %84 {strides = array<i32>} : memref<4x8x32xf32, #tpu.memory_space<vmem>>, vector<1x8x32xf32>,
    %c2_i32 = arith.constant 2 : i32
    %85 = arith.index_cast %c2_i32 : i32 to index
    %c0_35 = arith.constant 0 : index
    %c0_36 = arith.constant 0 : index
    %86 = vector.load %arg11[%85, %c0_35, %c0_36] : memref<4x8x128xf32, #tpu.memory_space<vmem>>, vector<1x8x128xf32>
    %87 = vector.shape_cast %86 : vector<1x8x128xf32> to vector<8x128xf32>
    %cst_37 = arith.constant dense<0.000000e+00> : vector<8x128xf32>
    %88 = tpu.matmul %80, %12, %cst_37 {dimension_numbers = #tpu.dot_dimension_numbers<[1], [0], [0], [1], [0, 0, 1, 1], [], []>} : vector<8x32xf32>, vector<32x128xf32>, vector<8x128xf32> -> vector<8x128xf32>
    %89 = arith.addf %87, %88 : vector<8x128xf32>
    %90 = vector.extract_strided_slice %89 {offsets = [0, 0], sizes = [8, 32], strides = [1, 1]} : vector<8x128xf32> to vector<8x32xf32>
    %91 = arith.negf %90 : vector<8x32xf32>
    %92 = math.exp %91 : vector<8x32xf32>
    %cst_38 = arith.constant 1.000000e+00 : f32
    %93 = vector.broadcast %cst_38 : f32 to vector<8x32xf32>
    %94 = arith.addf %93, %92 : vector<8x32xf32>
    %95 = arith.divf %93, %94 : vector<8x32xf32>
    %96 = vector.extract_strided_slice %89 {offsets = [0, 32], sizes = [8, 32], strides = [1, 1]} : vector<8x128xf32> to vector<8x32xf32>
    %97 = arith.negf %96 : vector<8x32xf32>
    %98 = math.exp %97 : vector<8x32xf32>
    %cst_39 = arith.constant 1.000000e+00 : f32
    %99 = vector.broadcast %cst_39 : f32 to vector<8x32xf32>
    %100 = arith.addf %99, %98 : vector<8x32xf32>
    %101 = arith.divf %99, %100 : vector<8x32xf32>
    %102 = vector.extract_strided_slice %89 {offsets = [0, 64], sizes = [8, 32], strides = [1, 1]} : vector<8x128xf32> to vector<8x32xf32>
    %103 = math.tanh %102 : vector<8x32xf32>
    %104 = vector.extract_strided_slice %89 {offsets = [0, 96], sizes = [8, 32], strides = [1, 1]} : vector<8x128xf32> to vector<8x32xf32>
    %105 = arith.negf %104 : vector<8x32xf32>
    %106 = math.exp %105 : vector<8x32xf32>
    %cst_40 = arith.constant 1.000000e+00 : f32
    %107 = vector.broadcast %cst_40 : f32 to vector<8x32xf32>
    %108 = arith.addf %107, %106 : vector<8x32xf32>
    %109 = arith.divf %107, %108 : vector<8x32xf32>
    %110 = arith.mulf %101, %78 : vector<8x32xf32>
    %111 = arith.mulf %95, %103 : vector<8x32xf32>
    %112 = arith.addf %110, %111 : vector<8x32xf32>
    %113 = math.tanh %112 : vector<8x32xf32>
    %114 = arith.mulf %109, %113 : vector<8x32xf32>
    %115 = arith.index_cast %c2_i32 : i32 to index
    %c0_41 = arith.constant 0 : index
    %c0_42 = arith.constant 0 : index
    %116 = vector.load %arg12[%115, %c0_41, %c0_42] : memref<4x8x32xf32, #tpu.memory_space<vmem>>, vector<1x8x32xf32>
    %117 = vector.shape_cast %116 : vector<1x8x32xf32> to vector<8x32xf32>
    %118 = vector.shape_cast %114 : vector<8x32xf32> to vector<1x8x32xf32>
    tpu.vector_store %arg12[%115, %c0_41, %c0_42], %118 {strides = array<i32>} : memref<4x8x32xf32, #tpu.memory_space<vmem>>, vector<1x8x32xf32>,
    %c3_i32 = arith.constant 3 : i32
    %119 = arith.index_cast %c3_i32 : i32 to index
    %c0_43 = arith.constant 0 : index
    %c0_44 = arith.constant 0 : index
    %120 = vector.load %arg11[%119, %c0_43, %c0_44] : memref<4x8x128xf32, #tpu.memory_space<vmem>>, vector<1x8x128xf32>
    %121 = vector.shape_cast %120 : vector<1x8x128xf32> to vector<8x128xf32>
    %cst_45 = arith.constant dense<0.000000e+00> : vector<8x128xf32>
    %122 = tpu.matmul %114, %12, %cst_45 {dimension_numbers = #tpu.dot_dimension_numbers<[1], [0], [0], [1], [0, 0, 1, 1], [], []>} : vector<8x32xf32>, vector<32x128xf32>, vector<8x128xf32> -> vector<8x128xf32>
    %123 = arith.addf %121, %122 : vector<8x128xf32>
    %124 = vector.extract_strided_slice %123 {offsets = [0, 0], sizes = [8, 32], strides = [1, 1]} : vector<8x128xf32> to vector<8x32xf32>
    %125 = arith.negf %124 : vector<8x32xf32>
    %126 = math.exp %125 : vector<8x32xf32>
    %cst_46 = arith.constant 1.000000e+00 : f32
    %127 = vector.broadcast %cst_46 : f32 to vector<8x32xf32>
    %128 = arith.addf %127, %126 : vector<8x32xf32>
    %129 = arith.divf %127, %128 : vector<8x32xf32>
    %130 = vector.extract_strided_slice %123 {offsets = [0, 32], sizes = [8, 32], strides = [1, 1]} : vector<8x128xf32> to vector<8x32xf32>
    %131 = arith.negf %130 : vector<8x32xf32>
    %132 = math.exp %131 : vector<8x32xf32>
    %cst_47 = arith.constant 1.000000e+00 : f32
    %133 = vector.broadcast %cst_47 : f32 to vector<8x32xf32>
    %134 = arith.addf %133, %132 : vector<8x32xf32>
    %135 = arith.divf %133, %134 : vector<8x32xf32>
    %136 = vector.extract_strided_slice %123 {offsets = [0, 64], sizes = [8, 32], strides = [1, 1]} : vector<8x128xf32> to vector<8x32xf32>
    %137 = math.tanh %136 : vector<8x32xf32>
    %138 = vector.extract_strided_slice %123 {offsets = [0, 96], sizes = [8, 32], strides = [1, 1]} : vector<8x128xf32> to vector<8x32xf32>
    %139 = arith.negf %138 : vector<8x32xf32>
    %140 = math.exp %139 : vector<8x32xf32>
    %cst_48 = arith.constant 1.000000e+00 : f32
    %141 = vector.broadcast %cst_48 : f32 to vector<8x32xf32>
    %142 = arith.addf %141, %140 : vector<8x32xf32>
    %143 = arith.divf %141, %142 : vector<8x32xf32>
    %144 = arith.mulf %135, %112 : vector<8x32xf32>
    %145 = arith.mulf %129, %137 : vector<8x32xf32>
    %146 = arith.addf %144, %145 : vector<8x32xf32>
    %147 = math.tanh %146 : vector<8x32xf32>
    %148 = arith.mulf %143, %147 : vector<8x32xf32>
    %149 = arith.index_cast %c3_i32 : i32 to index
    %c0_49 = arith.constant 0 : index
    %c0_50 = arith.constant 0 : index
    %150 = vector.load %arg12[%149, %c0_49, %c0_50] : memref<4x8x32xf32, #tpu.memory_space<vmem>>, vector<1x8x32xf32>
    %151 = vector.shape_cast %150 : vector<1x8x32xf32> to vector<8x32xf32>
    %152 = vector.shape_cast %148 : vector<8x32xf32> to vector<1x8x32xf32>
    tpu.vector_store %arg12[%149, %c0_49, %c0_50], %152 {strides = array<i32>} : memref<4x8x32xf32, #tpu.memory_space<vmem>>, vector<1x8x32xf32>,
    %c4_i32 = arith.constant 4 : i32
    %c0_51 = arith.constant 0 : index
    %c0_52 = arith.constant 0 : index
    %c0_53 = arith.constant 0 : index
    %153 = vector.load %arg13[%c0_51, %c0_52, %c0_53] : memref<2x8x32xf32, #tpu.memory_space<vmem>>, vector<1x8x32xf32>
    %154 = vector.shape_cast %153 : vector<1x8x32xf32> to vector<8x32xf32>
    %155 = vector.shape_cast %148 : vector<8x32xf32> to vector<1x8x32xf32>
    tpu.vector_store %arg13[%c0_51, %c0_52, %c0_53], %155 {strides = array<i32>} : memref<2x8x32xf32, #tpu.memory_space<vmem>>, vector<1x8x32xf32>,
    %c0_54 = arith.constant 0 : index
    %c0_55 = arith.constant 0 : index
    %c0_56 = arith.constant 0 : index
    %156 = vector.load %arg14[%c0_54, %c0_55, %c0_56] : memref<2x8x32xf32, #tpu.memory_space<vmem>>, vector<1x8x32xf32>
    %157 = vector.shape_cast %156 : vector<1x8x32xf32> to vector<8x32xf32>
    %158 = vector.shape_cast %146 : vector<8x32xf32> to vector<1x8x32xf32>
    tpu.vector_store %arg14[%c0_54, %c0_55, %c0_56], %158 {strides = array<i32>} : memref<2x8x32xf32, #tpu.memory_space<vmem>>, vector<1x8x32xf32>,
    %c0_57 = arith.constant 0 : index
    %c0_58 = arith.constant 0 : index
    %c0_59 = arith.constant 0 : index
    %159 = vector.load %arg12[%c0_57, %c0_58, %c0_59] : memref<4x8x32xf32, #tpu.memory_space<vmem>>, vector<4x8x32xf32>
    %160 = vector.shape_cast %159 : vector<4x8x32xf32> to vector<32x32xf32>
    %c0_60 = arith.constant 0 : index
    %c0_61 = arith.constant 0 : index
    %161 = vector.load %arg5[%c0_60, %c0_61] : memref<32x128xf32, #tpu.memory_space<vmem>>, vector<32x128xf32>
    %cst_62 = arith.constant dense<0.000000e+00> : vector<32x128xf32>
    %162 = tpu.matmul %160, %161, %cst_62 {dimension_numbers = #tpu.dot_dimension_numbers<[1], [0], [0], [1], [0, 0, 1, 1], [], []>} : vector<32x32xf32>, vector<32x128xf32>, vector<32x128xf32> -> vector<32x128xf32>
    %c0_63 = arith.constant 0 : index
    %c0_64 = arith.constant 0 : index
    %163 = vector.load %arg7[%c0_63, %c0_64] : memref<1x128xf32, #tpu.memory_space<vmem>>, vector<1x128xf32>
    %164 = vector.broadcast %163 : vector<1x128xf32> to vector<32x128xf32>
    %165 = arith.addf %162, %164 : vector<32x128xf32>
    %166 = vector.shape_cast %165 : vector<32x128xf32> to vector<4x8x128xf32>
    %c0_65 = arith.constant 0 : index
    %c0_66 = arith.constant 0 : index
    %c0_67 = arith.constant 0 : index
    %167 = vector.load %arg11[%c0_65, %c0_66, %c0_67] : memref<4x8x128xf32, #tpu.memory_space<vmem>>, vector<4x8x128xf32>
    tpu.vector_store %arg11[%c0_65, %c0_66, %c0_67], %166 {strides = array<i32>} : memref<4x8x128xf32, #tpu.memory_space<vmem>>, vector<4x8x128xf32>,
    %c0_68 = arith.constant 0 : index
    %c0_69 = arith.constant 0 : index
    %168 = vector.load %arg6[%c0_68, %c0_69] : memref<32x128xf32, #tpu.memory_space<vmem>>, vector<32x128xf32>
    %c1 = arith.constant 1 : index
    %c0_70 = arith.constant 0 : index
    %c0_71 = arith.constant 0 : index
    %169 = vector.load %arg13[%c1, %c0_70, %c0_71] : memref<2x8x32xf32, #tpu.memory_space<vmem>>, vector<1x8x32xf32>
    %170 = vector.shape_cast %169 : vector<1x8x32xf32> to vector<8x32xf32>
    %c1_72 = arith.constant 1 : index
    %c0_73 = arith.constant 0 : index
    %c0_74 = arith.constant 0 : index
    %171 = vector.load %arg14[%c1_72, %c0_73, %c0_74] : memref<2x8x32xf32, #tpu.memory_space<vmem>>, vector<1x8x32xf32>
    %172 = vector.shape_cast %171 : vector<1x8x32xf32> to vector<8x32xf32>
    %c0_i32_75 = arith.constant 0 : i32
    %173 = arith.index_cast %c0_i32_75 : i32 to index
    %c0_76 = arith.constant 0 : index
    %c0_77 = arith.constant 0 : index
    %174 = vector.load %arg11[%173, %c0_76, %c0_77] : memref<4x8x128xf32, #tpu.memory_space<vmem>>, vector<1x8x128xf32>
    %175 = vector.shape_cast %174 : vector<1x8x128xf32> to vector<8x128xf32>
    %cst_78 = arith.constant dense<0.000000e+00> : vector<8x128xf32>
    %176 = tpu.matmul %170, %168, %cst_78 {dimension_numbers = #tpu.dot_dimension_numbers<[1], [0], [0], [1], [0, 0, 1, 1], [], []>} : vector<8x32xf32>, vector<32x128xf32>, vector<8x128xf32> -> vector<8x128xf32>
    %177 = arith.addf %175, %176 : vector<8x128xf32>
    %178 = vector.extract_strided_slice %177 {offsets = [0, 0], sizes = [8, 32], strides = [1, 1]} : vector<8x128xf32> to vector<8x32xf32>
    %179 = arith.negf %178 : vector<8x32xf32>
    %180 = math.exp %179 : vector<8x32xf32>
    %cst_79 = arith.constant 1.000000e+00 : f32
    %181 = vector.broadcast %cst_79 : f32 to vector<8x32xf32>
    %182 = arith.addf %181, %180 : vector<8x32xf32>
    %183 = arith.divf %181, %182 : vector<8x32xf32>
    %184 = vector.extract_strided_slice %177 {offsets = [0, 32], sizes = [8, 32], strides = [1, 1]} : vector<8x128xf32> to vector<8x32xf32>
    %185 = arith.negf %184 : vector<8x32xf32>
    %186 = math.exp %185 : vector<8x32xf32>
    %cst_80 = arith.constant 1.000000e+00 : f32
    %187 = vector.broadcast %cst_80 : f32 to vector<8x32xf32>
    %188 = arith.addf %187, %186 : vector<8x32xf32>
    %189 = arith.divf %187, %188 : vector<8x32xf32>
    %190 = vector.extract_strided_slice %177 {offsets = [0, 64], sizes = [8, 32], strides = [1, 1]} : vector<8x128xf32> to vector<8x32xf32>
    %191 = math.tanh %190 : vector<8x32xf32>
    %192 = vector.extract_strided_slice %177 {offsets = [0, 96], sizes = [8, 32], strides = [1, 1]} : vector<8x128xf32> to vector<8x32xf32>
    %193 = arith.negf %192 : vector<8x32xf32>
    %194 = math.exp %193 : vector<8x32xf32>
    %cst_81 = arith.constant 1.000000e+00 : f32
    %195 = vector.broadcast %cst_81 : f32 to vector<8x32xf32>
    %196 = arith.addf %195, %194 : vector<8x32xf32>
    %197 = arith.divf %195, %196 : vector<8x32xf32>
    %198 = arith.mulf %189, %172 : vector<8x32xf32>
    %199 = arith.mulf %183, %191 : vector<8x32xf32>
    %200 = arith.addf %198, %199 : vector<8x32xf32>
    %201 = math.tanh %200 : vector<8x32xf32>
    %202 = arith.mulf %197, %201 : vector<8x32xf32>
    %203 = arith.index_cast %c0_i32_75 : i32 to index
    %c0_82 = arith.constant 0 : index
    %c0_83 = arith.constant 0 : index
    %204 = vector.load %arg12[%203, %c0_82, %c0_83] : memref<4x8x32xf32, #tpu.memory_space<vmem>>, vector<1x8x32xf32>
    %205 = vector.shape_cast %204 : vector<1x8x32xf32> to vector<8x32xf32>
    %206 = vector.shape_cast %202 : vector<8x32xf32> to vector<1x8x32xf32>
    tpu.vector_store %arg12[%203, %c0_82, %c0_83], %206 {strides = array<i32>} : memref<4x8x32xf32, #tpu.memory_space<vmem>>, vector<1x8x32xf32>,
    %c1_i32_84 = arith.constant 1 : i32
    %207 = arith.index_cast %c1_i32_84 : i32 to index
    %c0_85 = arith.constant 0 : index
    %c0_86 = arith.constant 0 : index
    %208 = vector.load %arg11[%207, %c0_85, %c0_86] : memref<4x8x128xf32, #tpu.memory_space<vmem>>, vector<1x8x128xf32>
    %209 = vector.shape_cast %208 : vector<1x8x128xf32> to vector<8x128xf32>
    %cst_87 = arith.constant dense<0.000000e+00> : vector<8x128xf32>
    %210 = tpu.matmul %202, %168, %cst_87 {dimension_numbers = #tpu.dot_dimension_numbers<[1], [0], [0], [1], [0, 0, 1, 1], [], []>} : vector<8x32xf32>, vector<32x128xf32>, vector<8x128xf32> -> vector<8x128xf32>
    %211 = arith.addf %209, %210 : vector<8x128xf32>
    %212 = vector.extract_strided_slice %211 {offsets = [0, 0], sizes = [8, 32], strides = [1, 1]} : vector<8x128xf32> to vector<8x32xf32>
    %213 = arith.negf %212 : vector<8x32xf32>
    %214 = math.exp %213 : vector<8x32xf32>
    %cst_88 = arith.constant 1.000000e+00 : f32
    %215 = vector.broadcast %cst_88 : f32 to vector<8x32xf32>
    %216 = arith.addf %215, %214 : vector<8x32xf32>
    %217 = arith.divf %215, %216 : vector<8x32xf32>
    %218 = vector.extract_strided_slice %211 {offsets = [0, 32], sizes = [8, 32], strides = [1, 1]} : vector<8x128xf32> to vector<8x32xf32>
    %219 = arith.negf %218 : vector<8x32xf32>
    %220 = math.exp %219 : vector<8x32xf32>
    %cst_89 = arith.constant 1.000000e+00 : f32
    %221 = vector.broadcast %cst_89 : f32 to vector<8x32xf32>
    %222 = arith.addf %221, %220 : vector<8x32xf32>
    %223 = arith.divf %221, %222 : vector<8x32xf32>
    %224 = vector.extract_strided_slice %211 {offsets = [0, 64], sizes = [8, 32], strides = [1, 1]} : vector<8x128xf32> to vector<8x32xf32>
    %225 = math.tanh %224 : vector<8x32xf32>
    %226 = vector.extract_strided_slice %211 {offsets = [0, 96], sizes = [8, 32], strides = [1, 1]} : vector<8x128xf32> to vector<8x32xf32>
    %227 = arith.negf %226 : vector<8x32xf32>
    %228 = math.exp %227 : vector<8x32xf32>
    %cst_90 = arith.constant 1.000000e+00 : f32
    %229 = vector.broadcast %cst_90 : f32 to vector<8x32xf32>
    %230 = arith.addf %229, %228 : vector<8x32xf32>
    %231 = arith.divf %229, %230 : vector<8x32xf32>
    %232 = arith.mulf %223, %200 : vector<8x32xf32>
    %233 = arith.mulf %217, %225 : vector<8x32xf32>
    %234 = arith.addf %232, %233 : vector<8x32xf32>
    %235 = math.tanh %234 : vector<8x32xf32>
    %236 = arith.mulf %231, %235 : vector<8x32xf32>
    %237 = arith.index_cast %c1_i32_84 : i32 to index
    %c0_91 = arith.constant 0 : index
    %c0_92 = arith.constant 0 : index
    %238 = vector.load %arg12[%237, %c0_91, %c0_92] : memref<4x8x32xf32, #tpu.memory_space<vmem>>, vector<1x8x32xf32>
    %239 = vector.shape_cast %238 : vector<1x8x32xf32> to vector<8x32xf32>
    %240 = vector.shape_cast %236 : vector<8x32xf32> to vector<1x8x32xf32>
    tpu.vector_store %arg12[%237, %c0_91, %c0_92], %240 {strides = array<i32>} : memref<4x8x32xf32, #tpu.memory_space<vmem>>, vector<1x8x32xf32>,
    %c2_i32_93 = arith.constant 2 : i32
    %241 = arith.index_cast %c2_i32_93 : i32 to index
    %c0_94 = arith.constant 0 : index
    %c0_95 = arith.constant 0 : index
    %242 = vector.load %arg11[%241, %c0_94, %c0_95] : memref<4x8x128xf32, #tpu.memory_space<vmem>>, vector<1x8x128xf32>
    %243 = vector.shape_cast %242 : vector<1x8x128xf32> to vector<8x128xf32>
    %cst_96 = arith.constant dense<0.000000e+00> : vector<8x128xf32>
    %244 = tpu.matmul %236, %168, %cst_96 {dimension_numbers = #tpu.dot_dimension_numbers<[1], [0], [0], [1], [0, 0, 1, 1], [], []>} : vector<8x32xf32>, vector<32x128xf32>, vector<8x128xf32> -> vector<8x128xf32>
    %245 = arith.addf %243, %244 : vector<8x128xf32>
    %246 = vector.extract_strided_slice %245 {offsets = [0, 0], sizes = [8, 32], strides = [1, 1]} : vector<8x128xf32> to vector<8x32xf32>
    %247 = arith.negf %246 : vector<8x32xf32>
    %248 = math.exp %247 : vector<8x32xf32>
    %cst_97 = arith.constant 1.000000e+00 : f32
    %249 = vector.broadcast %cst_97 : f32 to vector<8x32xf32>
    %250 = arith.addf %249, %248 : vector<8x32xf32>
    %251 = arith.divf %249, %250 : vector<8x32xf32>
    %252 = vector.extract_strided_slice %245 {offsets = [0, 32], sizes = [8, 32], strides = [1, 1]} : vector<8x128xf32> to vector<8x32xf32>
    %253 = arith.negf %252 : vector<8x32xf32>
    %254 = math.exp %253 : vector<8x32xf32>
    %cst_98 = arith.constant 1.000000e+00 : f32
    %255 = vector.broadcast %cst_98 : f32 to vector<8x32xf32>
    %256 = arith.addf %255, %254 : vector<8x32xf32>
    %257 = arith.divf %255, %256 : vector<8x32xf32>
    %258 = vector.extract_strided_slice %245 {offsets = [0, 64], sizes = [8, 32], strides = [1, 1]} : vector<8x128xf32> to vector<8x32xf32>
    %259 = math.tanh %258 : vector<8x32xf32>
    %260 = vector.extract_strided_slice %245 {offsets = [0, 96], sizes = [8, 32], strides = [1, 1]} : vector<8x128xf32> to vector<8x32xf32>
    %261 = arith.negf %260 : vector<8x32xf32>
    %262 = math.exp %261 : vector<8x32xf32>
    %cst_99 = arith.constant 1.000000e+00 : f32
    %263 = vector.broadcast %cst_99 : f32 to vector<8x32xf32>
    %264 = arith.addf %263, %262 : vector<8x32xf32>
    %265 = arith.divf %263, %264 : vector<8x32xf32>
    %266 = arith.mulf %257, %234 : vector<8x32xf32>
    %267 = arith.mulf %251, %259 : vector<8x32xf32>
    %268 = arith.addf %266, %267 : vector<8x32xf32>
    %269 = math.tanh %268 : vector<8x32xf32>
    %270 = arith.mulf %265, %269 : vector<8x32xf32>
    %271 = arith.index_cast %c2_i32_93 : i32 to index
    %c0_100 = arith.constant 0 : index
    %c0_101 = arith.constant 0 : index
    %272 = vector.load %arg12[%271, %c0_100, %c0_101] : memref<4x8x32xf32, #tpu.memory_space<vmem>>, vector<1x8x32xf32>
    %273 = vector.shape_cast %272 : vector<1x8x32xf32> to vector<8x32xf32>
    %274 = vector.shape_cast %270 : vector<8x32xf32> to vector<1x8x32xf32>
    tpu.vector_store %arg12[%271, %c0_100, %c0_101], %274 {strides = array<i32>} : memref<4x8x32xf32, #tpu.memory_space<vmem>>, vector<1x8x32xf32>,
    %c3_i32_102 = arith.constant 3 : i32
    %275 = arith.index_cast %c3_i32_102 : i32 to index
    %c0_103 = arith.constant 0 : index
    %c0_104 = arith.constant 0 : index
    %276 = vector.load %arg11[%275, %c0_103, %c0_104] : memref<4x8x128xf32, #tpu.memory_space<vmem>>, vector<1x8x128xf32>
    %277 = vector.shape_cast %276 : vector<1x8x128xf32> to vector<8x128xf32>
    %cst_105 = arith.constant dense<0.000000e+00> : vector<8x128xf32>
    %278 = tpu.matmul %270, %168, %cst_105 {dimension_numbers = #tpu.dot_dimension_numbers<[1], [0], [0], [1], [0, 0, 1, 1], [], []>} : vector<8x32xf32>, vector<32x128xf32>, vector<8x128xf32> -> vector<8x128xf32>
    %279 = arith.addf %277, %278 : vector<8x128xf32>
    %280 = vector.extract_strided_slice %279 {offsets = [0, 0], sizes = [8, 32], strides = [1, 1]} : vector<8x128xf32> to vector<8x32xf32>
    %281 = arith.negf %280 : vector<8x32xf32>
    %282 = math.exp %281 : vector<8x32xf32>
    %cst_106 = arith.constant 1.000000e+00 : f32
    %283 = vector.broadcast %cst_106 : f32 to vector<8x32xf32>
    %284 = arith.addf %283, %282 : vector<8x32xf32>
    %285 = arith.divf %283, %284 : vector<8x32xf32>
    %286 = vector.extract_strided_slice %279 {offsets = [0, 32], sizes = [8, 32], strides = [1, 1]} : vector<8x128xf32> to vector<8x32xf32>
    %287 = arith.negf %286 : vector<8x32xf32>
    %288 = math.exp %287 : vector<8x32xf32>
    %cst_107 = arith.constant 1.000000e+00 : f32
    %289 = vector.broadcast %cst_107 : f32 to vector<8x32xf32>
    %290 = arith.addf %289, %288 : vector<8x32xf32>
    %291 = arith.divf %289, %290 : vector<8x32xf32>
    %292 = vector.extract_strided_slice %279 {offsets = [0, 64], sizes = [8, 32], strides = [1, 1]} : vector<8x128xf32> to vector<8x32xf32>
    %293 = math.tanh %292 : vector<8x32xf32>
    %294 = vector.extract_strided_slice %279 {offsets = [0, 96], sizes = [8, 32], strides = [1, 1]} : vector<8x128xf32> to vector<8x32xf32>
    %295 = arith.negf %294 : vector<8x32xf32>
    %296 = math.exp %295 : vector<8x32xf32>
    %cst_108 = arith.constant 1.000000e+00 : f32
    %297 = vector.broadcast %cst_108 : f32 to vector<8x32xf32>
    %298 = arith.addf %297, %296 : vector<8x32xf32>
    %299 = arith.divf %297, %298 : vector<8x32xf32>
    %300 = arith.mulf %291, %268 : vector<8x32xf32>
    %301 = arith.mulf %285, %293 : vector<8x32xf32>
    %302 = arith.addf %300, %301 : vector<8x32xf32>
    %303 = math.tanh %302 : vector<8x32xf32>
    %304 = arith.mulf %299, %303 : vector<8x32xf32>
    %305 = arith.index_cast %c3_i32_102 : i32 to index
    %c0_109 = arith.constant 0 : index
    %c0_110 = arith.constant 0 : index
    %306 = vector.load %arg12[%305, %c0_109, %c0_110] : memref<4x8x32xf32, #tpu.memory_space<vmem>>, vector<1x8x32xf32>
    %307 = vector.shape_cast %306 : vector<1x8x32xf32> to vector<8x32xf32>
    %308 = vector.shape_cast %304 : vector<8x32xf32> to vector<1x8x32xf32>
    tpu.vector_store %arg12[%305, %c0_109, %c0_110], %308 {strides = array<i32>} : memref<4x8x32xf32, #tpu.memory_space<vmem>>, vector<1x8x32xf32>,
    %c4_i32_111 = arith.constant 4 : i32
    %c1_112 = arith.constant 1 : index
    %c0_113 = arith.constant 0 : index
    %c0_114 = arith.constant 0 : index
    %309 = vector.load %arg13[%c1_112, %c0_113, %c0_114] : memref<2x8x32xf32, #tpu.memory_space<vmem>>, vector<1x8x32xf32>
    %310 = vector.shape_cast %309 : vector<1x8x32xf32> to vector<8x32xf32>
    %311 = vector.shape_cast %304 : vector<8x32xf32> to vector<1x8x32xf32>
    tpu.vector_store %arg13[%c1_112, %c0_113, %c0_114], %311 {strides = array<i32>} : memref<2x8x32xf32, #tpu.memory_space<vmem>>, vector<1x8x32xf32>,
    %c1_115 = arith.constant 1 : index
    %c0_116 = arith.constant 0 : index
    %c0_117 = arith.constant 0 : index
    %312 = vector.load %arg14[%c1_115, %c0_116, %c0_117] : memref<2x8x32xf32, #tpu.memory_space<vmem>>, vector<1x8x32xf32>
    %313 = vector.shape_cast %312 : vector<1x8x32xf32> to vector<8x32xf32>
    %314 = vector.shape_cast %302 : vector<8x32xf32> to vector<1x8x32xf32>
    tpu.vector_store %arg14[%c1_115, %c0_116, %c0_117], %314 {strides = array<i32>} : memref<2x8x32xf32, #tpu.memory_space<vmem>>, vector<1x8x32xf32>,
    %c0_118 = arith.constant 0 : index
    %c0_119 = arith.constant 0 : index
    %c0_120 = arith.constant 0 : index
    %315 = vector.load %arg12[%c0_118, %c0_119, %c0_120] : memref<4x8x32xf32, #tpu.memory_space<vmem>>, vector<4x8x32xf32>
    %316 = vector.shape_cast %315 : vector<4x8x32xf32> to vector<32x32xf32>
    %c0_121 = arith.constant 0 : index
    %c0_122 = arith.constant 0 : index
    %317 = vector.load %arg8[%c0_121, %c0_122] : memref<32x1xf32, #tpu.memory_space<vmem>>, vector<32x1xf32>
    %cst_123 = arith.constant dense<0.000000e+00> : vector<32x1xf32>
    %318 = tpu.matmul %316, %317, %cst_123 {dimension_numbers = #tpu.dot_dimension_numbers<[1], [0], [0], [1], [0, 0, 1, 1], [], []>} : vector<32x32xf32>, vector<32x1xf32>, vector<32x1xf32> -> vector<32x1xf32>
    %c0_124 = arith.constant 0 : index
    %c0_125 = arith.constant 0 : index
    %319 = vector.load %arg9[%c0_124, %c0_125] : memref<1x1xf32, #tpu.memory_space<vmem>>, vector<1x1xf32>
    %320 = vector.broadcast %319 : vector<1x1xf32> to vector<32x1xf32>
    %321 = arith.addf %318, %320 : vector<32x1xf32>
    %322 = vector.shape_cast %321 : vector<32x1xf32> to vector<4x8xf32>
    %c0_126 = arith.constant 0 : index
    %c0_127 = arith.constant 0 : index
    %c0_128 = arith.constant 0 : index
    %323 = vector.load %arg10[%c0_126, %c0_127, %c0_128] : memref<1x4x8xf32, #tpu.memory_space<vmem>>, vector<1x4x8xf32>
    %324 = vector.shape_cast %323 : vector<1x4x8xf32> to vector<4x8xf32>
    %325 = vector.shape_cast %322 : vector<4x8xf32> to vector<1x4x8xf32>
    tpu.vector_store %arg10[%c0_126, %c0_127, %c0_128], %325 {strides = array<i32>} : memref<1x4x8xf32, #tpu.memory_space<vmem>>, vector<1x4x8xf32>,
    return
  }
  func.func @transform_0(%arg0: i32) -> (i32, i32, i32) {
    %c0_i32 = arith.constant 0 : i32
    %c0_i32_0 = arith.constant 0 : i32
    %c0_i32_1 = arith.constant 0 : i32
    return %arg0, %c0_i32, %c0_i32_0 : i32, i32, i32
  }
  func.func @transform_1(%arg0: i32) -> (i32, i32) {
    %c0_i32 = arith.constant 0 : i32
    %c0_i32_0 = arith.constant 0 : i32
    %c0_i32_1 = arith.constant 0 : i32
    return %c0_i32, %c0_i32_0 : i32, i32
  }
  func.func @transform_2(%arg0: i32) -> (i32, i32) {
    %c0_i32 = arith.constant 0 : i32
    %c0_i32_0 = arith.constant 0 : i32
    %c0_i32_1 = arith.constant 0 : i32
    return %c0_i32, %c0_i32_0 : i32, i32
  }
  func.func @transform_3(%arg0: i32) -> (i32, i32) {
    %c0_i32 = arith.constant 0 : i32
    %c0_i32_0 = arith.constant 0 : i32
    %c0_i32_1 = arith.constant 0 : i32
    return %c0_i32, %c0_i32_0 : i32, i32
  }
  func.func @transform_4(%arg0: i32) -> (i32, i32) {
    %c0_i32 = arith.constant 0 : i32
    %c0_i32_0 = arith.constant 0 : i32
    %c0_i32_1 = arith.constant 0 : i32
    return %c0_i32, %c0_i32_0 : i32, i32
  }
  func.func @transform_5(%arg0: i32) -> (i32, i32) {
    %c0_i32 = arith.constant 0 : i32
    %c0_i32_0 = arith.constant 0 : i32
    %c0_i32_1 = arith.constant 0 : i32
    return %c0_i32, %c0_i32_0 : i32, i32
  }
  func.func @transform_6(%arg0: i32) -> (i32, i32) {
    %c0_i32 = arith.constant 0 : i32
    %c0_i32_0 = arith.constant 0 : i32
    %c0_i32_1 = arith.constant 0 : i32
    return %c0_i32, %c0_i32_0 : i32, i32
  }
  func.func @transform_7(%arg0: i32) -> (i32, i32) {
    %c0_i32 = arith.constant 0 : i32
    %c0_i32_0 = arith.constant 0 : i32
    %c0_i32_1 = arith.constant 0 : i32
    return %c0_i32, %c0_i32_0 : i32, i32
  }
  func.func @transform_8(%arg0: i32) -> (i32, i32) {
    %c0_i32 = arith.constant 0 : i32
    %c0_i32_0 = arith.constant 0 : i32
    %c0_i32_1 = arith.constant 0 : i32
    return %c0_i32, %c0_i32_0 : i32, i32
  }
  func.func @transform_9(%arg0: i32) -> (i32, i32, i32) {
    %c0_i32 = arith.constant 0 : i32
    %c0_i32_0 = arith.constant 0 : i32
    %c0_i32_1 = arith.constant 0 : i32
    return %arg0, %c0_i32, %c0_i32_0 : i32, i32, i32
  }
}

</mosaic_0001>

<llo_original>
// kernel: tpu_custom_call.1
$region0: #{tpu_custom_call.1}
  #allocation0 [shape = 'u32[]', space=smem, size = 0x4, offset = 0x4, fixed_abs, tag = 'smem constant byte address 0x4 - core index']
  #allocation1 [shape = 'u32[144,128]{1,0:T(1,128)}', space=vmem, size = 0x12000, scoped, tag = 'internal scratch']
  #allocation2 [shape = 'f32[4,8,128]{2,1,0:T(8,128)}', space=vmem, size = 0x4000, scoped, tag = 'scratch operand']
  #allocation3 [shape = 'f32[4,8,32]{2,1,0:T(8,128)}', space=vmem, size = 0x4000, scoped, tag = 'scratch operand']
  #allocation4 [shape = 'f32[2,8,32]{2,1,0:T(8,128)}', space=vmem, size = 0x2000, scoped, tag = 'scratch operand']
  #allocation5 [shape = 'f32[2,8,32]{2,1,0:T(8,128)}', space=vmem, size = 0x2000, scoped, tag = 'scratch operand']
  #allocation6 [shape = 'f32[1,1]{1,0:T(1,128)S(1)}', space=vmem, size = 0x200, scoped, tag = 'scoped memory for tpu_custom_call.1']
  %s0 = inlined_call_operand.hbm [shape: f32[8,8,16], index: 0, kind: input, shape index: {}]
  %s1 = inlined_call_operand.hbm [shape: f32[16,128], index: 1, kind: input, shape index: {}]
  %s2 = inlined_call_operand.vmem [shape: f32[32,128], index: 2, kind: input, shape index: {}]
  %s3 = inlined_call_operand.vmem [shape: f32[1,128], index: 3, kind: input, shape index: {}]
  %s4 = inlined_call_operand.hbm [shape: f32[32,128], index: 4, kind: input, shape index: {}]
  %s5 = inlined_call_operand.hbm [shape: f32[32,128], index: 5, kind: input, shape index: {}]
  %s6 = inlined_call_operand.vmem [shape: f32[1,128], index: 6, kind: input, shape index: {}]
  %s7 = inlined_call_operand.vmem [shape: f32[32,1], index: 7, kind: input, shape index: {}]
  %s8 = inlined_call_operand.<no memory space> [shape: f32[1,1], index: 8, kind: input, shape index: {}]
  %s9 = inlined_call_operand.hbm [shape: f32[2,4,8], index: 9, kind: output, shape index: {}]
  %s10 = sld [smem:[#allocation0]]
  $region89: #{tpu_custom_call.1} parent=0
    _
  %s12 = ssub.s32 1, %s10
  %s13 = scalar_select 0, %s12, %s10
  %v14 = vstv %s8
  %15 = vst [vmem:[#allocation6] sm:$0x1] %v14
  $region1: #{tpu_custom_call.1} parent=0
    #allocation7 [shape = 'u8[32768]{0}', space=vmem, size = 0x8000, scoped, tag = 'input window, operand 0']
    #allocation8 [shape = 's32[2]{0}', space=sflag, size = 0x8, scoped, tag = 'scoped memory for tpu_custom_call.1']
    #allocation9 [shape = 's32[2]{0}', space=sflag, size = 0x8, scoped, tag = 'scoped memory for tpu_custom_call.1']
    #allocation10 [shape = 'u8[8192]{0}', space=vmem, size = 0x2000, scoped, tag = 'input window, operand 1, single buffered']
    #allocation11 [shape = 's32[1]{0}', space=sflag, size = 0x4, scoped, tag = 'scoped memory for tpu_custom_call.1']
    #allocation12 [shape = 'u8[16384]{0}', space=vmem, size = 0x4000, scoped, tag = 'input window, operand 4, single buffered']
    #allocation13 [shape = 'u8[16384]{0}', space=vmem, size = 0x4000, scoped, tag = 'input window, operand 5, single buffered']
    #allocation14 [shape = 's32[1]{0}', space=sflag, size = 0x4, scoped, tag = 'scoped memory for tpu_custom_call.1']
    #allocation15 [shape = 'u8[4096]{0}', space=vmem, size = 0x1000, scoped, tag = 'output window, operand 0']
    %16 = vsyncpa [#allocation8], 0
    %s17 = scalar_lea.sflag [#allocation8], 1
    %18 = vsyncpa %s17, 0
    %19 = vsyncpa [#allocation11], 0
    %20 = vsyncpa [#allocation14], 0
    %21 = vsyncpa [#allocation9], 0
    %s22 = scalar_lea.sflag [#allocation9], 1
    %23 = vsyncpa %s22, 0
    loop: start=0, step=1, limit=4
    $region2: #{tpu_custom_call.1} parent=1 // loop_pre_header
      _
    $region3: #{tpu_custom_call.1} parent=1 // loop_header
      %s25 = sphi 0, %s29
      %p26 = scmp.ge.s32.totalorder %s25, 4
      %s35 = sphi 0, %s37
      %s38 = sphi 0, %s35
      %s39 = sphi 0, %s38
      %s55 = sphi 0, %s39
      %s59 = sphi 0, %s59
      %s61 = sphi 0, %s59
      %s62 = sphi 0, %s61
      %s76 = sphi 0, %s62
      %s80 = sphi 0, %s80
      %s82 = sphi 0, %s80
      %s83 = sphi 0, %s82
      %s97 = sphi 0, %s83
      %s101 = sphi 0, %s101
      %s103 = sphi 0, %s101
      %s104 = sphi 0, %s103
      %s118 = sphi 0, %s104
      %s122 = sphi 0, %s122
      %s124 = sphi 0, %s122
      %s125 = sphi 0, %s124
      %s139 = sphi 0, %s125
      %s143 = sphi 0, %s143
      %s145 = sphi 0, %s143
      %s146 = sphi 0, %s145
      %s160 = sphi 0, %s146
      %s164 = sphi 0, %s164
      %s166 = sphi 0, %s164
      %s167 = sphi 0, %s166
      %s181 = sphi 0, %s167
      %s185 = sphi 0, %s185
      %s187 = sphi 0, %s185
      %s188 = sphi 0, %s187
      %s202 = sphi 0, %s188
      %s206 = sphi 0, %s206
      %s208 = sphi 0, %s206
      %s209 = sphi 0, %s208
      %s223 = sphi 0, %s209
      %s229 = sphi 0, %s231
      %s232 = sphi 0, %s229
      %s233 = sphi 0, %s232
      %s249 = sphi 0, %s233
    $region4: #{tpu_custom_call.1} parent=1 // loop_header_branch
      %28 = sbr.rel (%p26) target = $region8
    $region5: #{tpu_custom_call.1} parent=1 // loop_body
      %s30 = ssub.s32 %s25, 1
      %s31 = ssub.s32 %s25, 2
      %s32 = sadd.s32 %s25, 1
      %s33 = ssub.s32 %s25, %s32
      %p34 = scmp.eq.s32.totalorder %s33, 0
      %s36 = sadd.s32 %s35, 1
      %s37 = scalar_select %p34, %s35, %s36
      %p40 = pneg %p34
      %p41 = scmp.eq.s32.totalorder %s25, 1
      %p42 = por %p40, %p41
      %p43 = scmp.ne.s32.totalorder %s35, %s38
      %p44 = scmp.eq.s32.totalorder %s25, 0
      %p45 = por %p43, %p44
      %p46 = scmp.ne.s32.totalorder %s35, %s38
      %p47 = scmp.eq.s32.totalorder %s30, 1
      %p48 = por %p46, %p47
      %p49 = scmp.ne.s32.totalorder %s38, %s39
      %p50 = scmp.eq.s32.totalorder %s30, 0
      %p51 = por %p49, %p50
      %p52 = scmp.ne.s32.totalorder %s38, %s39
      %p53 = scmp.eq.s32.totalorder %s31, 1
      %p54 = por %p52, %p53
      %p56 = scmp.ne.s32.totalorder %s39, %s55
      %p57 = scmp.eq.s32.totalorder %s31, 0
      %p58 = por %p56, %p57
      %s60 = sadd.s32 %s59, 1
      %p63 = scmp.eq.s32.totalorder %s25, 1
      %p64 = scmp.ne.s32.totalorder %s59, %s61
      %p65 = scmp.eq.s32.totalorder %s25, 0
      %p66 = por %p64, %p65
      %p67 = scmp.ne.s32.totalorder %s59, %s61
      %p68 = scmp.eq.s32.totalorder %s30, 1
      %p69 = por %p67, %p68
      %p70 = scmp.ne.s32.totalorder %s61, %s62
      %p71 = scmp.eq.s32.totalorder %s30, 0
      %p72 = por %p70, %p71
      %p73 = scmp.ne.s32.totalorder %s61, %s62
      %p74 = scmp.eq.s32.totalorder %s31, 1
      %p75 = por %p73, %p74
      %p77 = scmp.ne.s32.totalorder %s62, %s76
      %p78 = scmp.eq.s32.totalorder %s31, 0
      %p79 = por %p77, %p78
      %s81 = sadd.s32 %s80, 1
      %p84 = scmp.eq.s32.totalorder %s25, 1
      %p85 = scmp.ne.s32.totalorder %s80, %s82
      %p86 = scmp.eq.s32.totalorder %s25, 0
      %p87 = por %p85, %p86
      %p88 = scmp.ne.s32.totalorder %s80, %s82
      %p89 = scmp.eq.s32.totalorder %s30, 1
      %p90 = por %p88, %p89
      %p91 = scmp.ne.s32.totalorder %s82, %s83
      %p92 = scmp.eq.s32.totalorder %s30, 0
      %p93 = por %p91, %p92
      %p94 = scmp.ne.s32.totalorder %s82, %s83
      %p95 = scmp.eq.s32.totalorder %s31, 1
      %p96 = por %p94, %p95
      %p98 = scmp.ne.s32.totalorder %s83, %s97
      %p99 = scmp.eq.s32.totalorder %s31, 0
      %p100 = por %p98, %p99
      %s102 = sadd.s32 %s101, 1
      %p105 = scmp.eq.s32.totalorder %s25, 1
      %p106 = scmp.ne.s32.totalorder %s101, %s103
      %p107 = scmp.eq.s32.totalorder %s25, 0
      %p108 = por %p106, %p107
      %p109 = scmp.ne.s32.totalorder %s101, %s103
      %p110 = scmp.eq.s32.totalorder %s30, 1
      %p111 = por %p109, %p110
      %p112 = scmp.ne.s32.totalorder %s103, %s104
      %p113 = scmp.eq.s32.totalorder %s30, 0
      %p114 = por %p112, %p113
      %p115 = scmp.ne.s32.totalorder %s103, %s104
      %p116 = scmp.eq.s32.totalorder %s31, 1
      %p117 = por %p115, %p116
      %p119 = scmp.ne.s32.totalorder %s104, %s118
      %p120 = scmp.eq.s32.totalorder %s31, 0
      %p121 = por %p119, %p120
      %s123 = sadd.s32 %s122, 1
      %p126 = scmp.eq.s32.totalorder %s25, 1
      %p127 = scmp.ne.s32.totalorder %s122, %s124
      %p128 = scmp.eq.s32.totalorder %s25, 0
      %p129 = por %p127, %p128
      %p130 = scmp.ne.s32.totalorder %s122, %s124
      %p131 = scmp.eq.s32.totalorder %s30, 1
      %p132 = por %p130, %p131
      %p133 = scmp.ne.s32.totalorder %s124, %s125
      %p134 = scmp.eq.s32.totalorder %s30, 0
      %p135 = por %p133, %p134
      %p136 = scmp.ne.s32.totalorder %s124, %s125
      %p137 = scmp.eq.s32.totalorder %s31, 1
      %p138 = por %p136, %p137
      %p140 = scmp.ne.s32.totalorder %s125, %s139
      %p141 = scmp.eq.s32.totalorder %s31, 0
      %p142 = por %p140, %p141
      %s144 = sadd.s32 %s143, 1
      %p147 = scmp.eq.s32.totalorder %s25, 1
      %p148 = scmp.ne.s32.totalorder %s143, %s145
      %p149 = scmp.eq.s32.totalorder %s25, 0
      %p150 = por %p148, %p149
      %p151 = scmp.ne.s32.totalorder %s143, %s145
      %p152 = scmp.eq.s32.totalorder %s30, 1
      %p153 = por %p151, %p152
      %p154 = scmp.ne.s32.totalorder %s145, %s146
      %p155 = scmp.eq.s32.totalorder %s30, 0
      %p156 = por %p154, %p155
      %p157 = scmp.ne.s32.totalorder %s145, %s146
      %p158 = scmp.eq.s32.totalorder %s31, 1
      %p159 = por %p157, %p158
      %p161 = scmp.ne.s32.totalorder %s146, %s160
      %p162 = scmp.eq.s32.totalorder %s31, 0
      %p163 = por %p161, %p162
      %s165 = sadd.s32 %s164, 1
      %p168 = scmp.eq.s32.totalorder %s25, 1
      %p169 = scmp.ne.s32.totalorder %s164, %s166
      %p170 = scmp.eq.s32.totalorder %s25, 0
      %p171 = por %p169, %p170
      %p172 = scmp.ne.s32.totalorder %s164, %s166
      %p173 = scmp.eq.s32.totalorder %s30, 1
      %p174 = por %p172, %p173
      %p175 = scmp.ne.s32.totalorder %s166, %s167
      %p176 = scmp.eq.s32.totalorder %s30, 0
      %p177 = por %p175, %p176
      %p178 = scmp.ne.s32.totalorder %s166, %s167
      %p179 = scmp.eq.s32.totalorder %s31, 1
      %p180 = por %p178, %p179
      %p182 = scmp.ne.s32.totalorder %s167, %s181
      %p183 = scmp.eq.s32.totalorder %s31, 0
      %p184 = por %p182, %p183
      %s186 = sadd.s32 %s185, 1
      %p189 = scmp.eq.s32.totalorder %s25, 1
      %p190 = scmp.ne.s32.totalorder %s185, %s187
      %p191 = scmp.eq.s32.totalorder %s25, 0
      %p192 = por %p190, %p191
      %p193 = scmp.ne.s32.totalorder %s185, %s187
      %p194 = scmp.eq.s32.totalorder %s30, 1
      %p195 = por %p193, %p194
      %p196 = scmp.ne.s32.totalorder %s187, %s188
      %p197 = scmp.eq.s32.totalorder %s30, 0
      %p198 = por %p196, %p197
      %p199 = scmp.ne.s32.totalorder %s187, %s188
      %p200 = scmp.eq.s32.totalorder %s31, 1
      %p201 = por %p199, %p200
      %p203 = scmp.ne.s32.totalorder %s188, %s202
      %p204 = scmp.eq.s32.totalorder %s31, 0
      %p205 = por %p203, %p204
      %s207 = sadd.s32 %s206, 1
      %p210 = scmp.eq.s32.totalorder %s25, 1
      %p211 = scmp.ne.s32.totalorder %s206, %s208
      %p212 = scmp.eq.s32.totalorder %s25, 0
      %p213 = por %p211, %p212
      %p214 = scmp.ne.s32.totalorder %s206, %s208
      %p215 = scmp.eq.s32.totalorder %s30, 1
      %p216 = por %p214, %p215
      %p217 = scmp.ne.s32.totalorder %s208, %s209
      %p218 = scmp.eq.s32.totalorder %s30, 0
      %p219 = por %p217, %p218
      %p220 = scmp.ne.s32.totalorder %s208, %s209
      %p221 = scmp.eq.s32.totalorder %s31, 1
      %p222 = por %p220, %p221
      %p224 = scmp.ne.s32.totalorder %s209, %s223
      %p225 = scmp.eq.s32.totalorder %s31, 0
      %p226 = por %p224, %p225
      %s227 = ssub.s32 %s25, %s32
      %p228 = scmp.eq.s32.totalorder %s227, 0
      %s230 = sadd.s32 %s229, 1
      %s231 = scalar_select %p228, %s229, %s230
      %p234 = pneg %p228
      %p235 = scmp.eq.s32.totalorder %s25, 1
      %p236 = por %p234, %p235
      %p237 = scmp.ne.s32.totalorder %s229, %s232
      %p238 = scmp.eq.s32.totalorder %s25, 0
      %p239 = por %p237, %p238
      %p240 = scmp.ne.s32.totalorder %s229, %s232
      %p241 = scmp.eq.s32.totalorder %s30, 1
      %p242 = por %p240, %p241
      %p243 = scmp.ne.s32.totalorder %s232, %s233
      %p244 = scmp.eq.s32.totalorder %s30, 0
      %p245 = por %p243, %p244
      %p246 = scmp.ne.s32.totalorder %s232, %s233
      %p247 = scmp.eq.s32.totalorder %s31, 1
      %p248 = por %p246, %p247
      %p250 = scmp.ne.s32.totalorder %s233, %s249
      %p251 = scmp.eq.s32.totalorder %s31, 0
      %p252 = por %p250, %p251
      %p253 = scmp.le.s32.totalorder 1, %s25
      %p254 = scmp.lt.s32.totalorder %s25, 3
      %p255 = pnand %p253, %p254
      %p256 = pneg %p255
      // Predicated region
      $region9: #{tpu_custom_call.1} parent=5 // pred_check
        _
      $region10: #{tpu_custom_call.1} parent=5 // pred_check_branch
        %258 = sbr.rel (%p255) target = $region12
      $region11: #{tpu_custom_call.1} parent=5 // pred_region
        %s259 = ssub.s32 %s25, 1
        // Predicated region
        $region13: #{tpu_custom_call.1} parent=11 // pred_check
          %p260 = pneg %p72
        $region14: #{tpu_custom_call.1} parent=11 // pred_check_branch
          %262 = sbr.rel (%p260) target = $region16
        $region15: #{tpu_custom_call.1} parent=11 // pred_region
          %s264 = ssub.s32 256, 256
          %265 = vsyncadd [#allocation11], %s264
          %s266 = sshll.u32 [#allocation10], 4
          %s267 = int_to_ptr.vmem [resolvable:$true] %s266
          %272 = dma.hbm_to_vmem [thread:$0]  %s1, 256, %s267, [#allocation11], 128, 128, 8
        $region16: #{tpu_custom_call.1} parent=11 // pred_fallthru
          _
        // Predicated region
        $region17: #{tpu_custom_call.1} parent=11 // pred_check
          %p273 = pneg %p93
        $region18: #{tpu_custom_call.1} parent=11 // pred_check_branch
          %275 = sbr.rel (%p273) target = $region20
        $region19: #{tpu_custom_call.1} parent=11 // pred_region
          _
        $region20: #{tpu_custom_call.1} parent=11 // pred_fallthru
          _
        // Predicated region
        $region21: #{tpu_custom_call.1} parent=11 // pred_check
          %p276 = pneg %p114
        $region22: #{tpu_custom_call.1} parent=11 // pred_check_branch
          %278 = sbr.rel (%p276) target = $region24
        $region23: #{tpu_custom_call.1} parent=11 // pred_region
          _
        $region24: #{tpu_custom_call.1} parent=11 // pred_fallthru
          _
        // Predicated region
        $region25: #{tpu_custom_call.1} parent=11 // pred_check
          %p279 = pneg %p135
        $region26: #{tpu_custom_call.1} parent=11 // pred_check_branch
          %281 = sbr.rel (%p279) target = $region28
        $region27: #{tpu_custom_call.1} parent=11 // pred_region
          %s283 = ssub.s32 512, 512
          %284 = vsyncadd [#allocation11], %s283
          %s285 = sshll.u32 [#allocation12], 4
          %s286 = int_to_ptr.vmem [resolvable:$true] %s285
          %291 = dma.hbm_to_vmem [thread:$0]  %s4, 512, %s286, [#allocation11], 128, 128, 8
        $region28: #{tpu_custom_call.1} parent=11 // pred_fallthru
          _
        // Predicated region
        $region29: #{tpu_custom_call.1} parent=11 // pred_check
          %p292 = pneg %p156
        $region30: #{tpu_custom_call.1} parent=11 // pred_check_branch
          %294 = sbr.rel (%p292) target = $region32
        $region31: #{tpu_custom_call.1} parent=11 // pred_region
          %s296 = ssub.s32 512, 512
          %297 = vsyncadd [#allocation14], %s296
          %s298 = sshll.u32 [#allocation13], 4
          %s299 = int_to_ptr.vmem [resolvable:$true] %s298
          %304 = dma.hbm_to_vmem [thread:$0]  %s5, 512, %s299, [#allocation14], 128, 128, 8
        $region32: #{tpu_custom_call.1} parent=11 // pred_fallthru
          _
        // Predicated region
        $region33: #{tpu_custom_call.1} parent=11 // pred_check
          %p305 = pneg %p177
        $region34: #{tpu_custom_call.1} parent=11 // pred_check_branch
          %307 = sbr.rel (%p305) target = $region36
        $region35: #{tpu_custom_call.1} parent=11 // pred_region
          _
        $region36: #{tpu_custom_call.1} parent=11 // pred_fallthru
          _
        // Predicated region
        $region37: #{tpu_custom_call.1} parent=11 // pred_check
          %p308 = pneg %p198
        $region38: #{tpu_custom_call.1} parent=11 // pred_check_branch
          %310 = sbr.rel (%p308) target = $region40
        $region39: #{tpu_custom_call.1} parent=11 // pred_region
          _
        $region40: #{tpu_custom_call.1} parent=11 // pred_fallthru
          _
        // Predicated region
        $region41: #{tpu_custom_call.1} parent=11 // pred_check
          %p311 = pneg %p219
        $region42: #{tpu_custom_call.1} parent=11 // pred_check_branch
          %313 = sbr.rel (%p311) target = $region44
        $region43: #{tpu_custom_call.1} parent=11 // pred_region
          _
        $region44: #{tpu_custom_call.1} parent=11 // pred_fallthru
          _
      $region12: #{tpu_custom_call.1} parent=5 // pred_fallthru
        _
      %p314 = scmp.lt.s32.totalorder %s25, 2
      // Predicated region
      $region45: #{tpu_custom_call.1} parent=5 // pred_check
        %p315 = pneg %p314
      $region46: #{tpu_custom_call.1} parent=5 // pred_check_branch
        %317 = sbr.rel (%p315) target = $region48
      $region47: #{tpu_custom_call.1} parent=5 // pred_region
        // Predicated region
        $region49: #{tpu_custom_call.1} parent=47 // pred_check
          %p318 = pneg %p45
        $region50: #{tpu_custom_call.1} parent=47 // pred_check_branch
          %320 = sbr.rel (%p318) target = $region52
        $region51: #{tpu_custom_call.1} parent=47 // pred_region
          %s321 = sand.u32 %s35, 1
          %s322 = scalar_lea.sflag [#allocation8], %s321
          %s323 = sand.u32 %s35, 1
          %s324 = smul.addr %s323, 32
          %s325 = scalar_lea.vmem [#allocation7], %s324
          %s326 = smul.u32 4, %s25
          %s328 = ssub.s32 512, 512
          %329 = vsyncadd %s322, %s328
          %s330 = smul.addr %s326, 128
          %s331 = scalar_lea.hbm %s0, %s330
          %s332 = sshll.u32 %s325, 4
          %s333 = int_to_ptr.vmem [resolvable:$true] %s332
          %338 = dma.hbm_to_vmem [thread:$0]  %s331, 512, %s333, %s322, 128, 128, 8
        $region52: #{tpu_custom_call.1} parent=47 // pred_fallthru
          _
      $region48: #{tpu_custom_call.1} parent=5 // pred_fallthru
        _
      %p339 = scmp.le.s32.totalorder 1, %s25
      %p340 = scmp.lt.s32.totalorder %s25, 3
      %p341 = pnand %p339, %p340
      %p342 = pneg %p341
      // Predicated region
      $region53: #{tpu_custom_call.1} parent=5 // pred_check
        _
      $region54: #{tpu_custom_call.1} parent=5 // pred_check_branch
        %344 = sbr.rel (%p341) target = $region56
      $region55: #{tpu_custom_call.1} parent=5 // pred_region
        %s345 = ssub.s32 %s25, 1
        %s346 = sand.u32 %s38, 1
        %s347 = scalar_lea.sflag [#allocation8], %s346
        %s348 = sand.u32 %s38, 1
        %s349 = smul.addr %s348, 32
        %s350 = scalar_lea.vmem [#allocation7], %s349
        // Predicated region
        $region57: #{tpu_custom_call.1} parent=55 // pred_check
          %p351 = pneg %p51
        $region58: #{tpu_custom_call.1} parent=55 // pred_check_branch
          %353 = sbr.rel (%p351) target = $region60
        $region59: #{tpu_custom_call.1} parent=55 // pred_region
          %354 = dma.done %s347, 512
        $region60: #{tpu_custom_call.1} parent=55 // pred_fallthru
          _
        // Predicated region
        $region61: #{tpu_custom_call.1} parent=55 // pred_check
          %p355 = pneg %p72
        $region62: #{tpu_custom_call.1} parent=55 // pred_check_branch
          %357 = sbr.rel (%p355) target = $region64
        $region63: #{tpu_custom_call.1} parent=55 // pred_region
          %358 = dma.done [#allocation11], 256
        $region64: #{tpu_custom_call.1} parent=55 // pred_fallthru
          _
        // Predicated region
        $region65: #{tpu_custom_call.1} parent=55 // pred_check
          %p359 = pneg %p135
        $region66: #{tpu_custom_call.1} parent=55 // pred_check_branch
          %361 = sbr.rel (%p359) target = $region68
        $region67: #{tpu_custom_call.1} parent=55 // pred_region
          %362 = dma.done [#allocation11], 512
        $region68: #{tpu_custom_call.1} parent=55 // pred_fallthru
          _
        // Predicated region
        $region69: #{tpu_custom_call.1} parent=55 // pred_check
          %p363 = pneg %p156
        $region70: #{tpu_custom_call.1} parent=55 // pred_check_branch
          %365 = sbr.rel (%p363) target = $region72
        $region71: #{tpu_custom_call.1} parent=55 // pred_region
          %366 = dma.done [#allocation14], 512
        $region72: #{tpu_custom_call.1} parent=55 // pred_fallthru
          _
        %s367 = sand.u32 %s38, 1
        %s368 = scalar_lea.sflag [#allocation8], %s367
        %s369 = sand.u32 %s38, 1
        %s370 = smul.addr %s369, 32
        %s371 = scalar_lea.vmem [#allocation7], %s370
        %p372 = pneg %p51
        %p373 = pneg %p48
        %p374 = pneg %p72
        %p375 = pneg %p69
        %p376 = pneg %p93
        %p377 = pneg %p90
        %p378 = pneg %p114
        %p379 = pneg %p111
        %p380 = pneg %p135
        %p381 = pneg %p132
        %p382 = pneg %p156
        %p383 = pneg %p153
        %p384 = pneg %p177
        %p385 = pneg %p174
        %p386 = pneg %p198
        %p387 = pneg %p195
        %p388 = pneg %p219
        %p389 = pneg %p216
        %p390 = pneg %p245
        %p391 = pneg %p242
        %s392 = sand.u32 %s232, 1
        %s393 = scalar_lea.sflag [#allocation9], %s392
        %s394 = sand.u32 %s232, 1
        %s395 = smul.addr %s394, 4
        %s396 = scalar_lea.vmem [#allocation15], %s395
        %s397 = smul.u32 4, %s30
        %p398 = scmp.eq.s32.totalorder %s30, 0
        // Predicated region
        $region73: #{tpu_custom_call.1} parent=55 // pred_check
          %p399 = pneg %p398
        $region74: #{tpu_custom_call.1} parent=55 // pred_check_branch
          %401 = sbr.rel (%p399) target = $region76
        $region75: #{tpu_custom_call.1} parent=55 // pred_region
          %vm402 = vcmask 261120
          %403 = vst.msk [vmem:[#allocation4] sm:$0xff] %vm402, 0.0
          %404 = vst.msk [vmem:[#allocation4 + $0x8] sm:$0xff] %vm402, 0.0
          %405 = vst.msk [vmem:[#allocation5] sm:$0xff] %vm402, 0.0
          %406 = vst.msk [vmem:[#allocation5 + $0x8] sm:$0xff] %vm402, 0.0
        $region76: #{tpu_custom_call.1} parent=55 // pred_fallthru
          _
        %v407 = vld [vmem:[%s350] sm:$0xff]
        %v408 = vld [vmem:[%s350 + $0x8] sm:$0xff]
        %v409 = vld [vmem:[%s350 + $0x10] sm:$0xff]
        %v410 = vld [vmem:[%s350 + $0x18] sm:$0xff]
        %v411 = vld [vmem:[#allocation10] sm:$0xff]
        %v412 = vld [vmem:[#allocation10 + $0x8] sm:$0xff]
        %v413 = vld [vmem:[%s3] sm:$0x1]
        %v415 = vlaneseq
        %v416 = vshrl.u32 %v415, 7
        %v417 = vsub.s32 0, %v416
        %v418 = vrot.slane %v413, %v417
        %vm420 = vcmask 130048
        %v422 = vsel %vm420, %v407, 0
        %v425 = vsel %vm420, %v408, 0
        %v428 = vsel %vm420, %v409, 0
        %v431 = vsel %vm420, %v410, 0
        %433 = vmatprep.subr.mxu0 0.0
        %434 = vmatpush1.msra.mxu0 %v411
        %435 = vmatprep.subr.mxu0 0.0
        %436 = vmatpush1.msra.mxu0 %v412
        %437 = vmatprep.subr.mxu0 0.0
        %438 = vmatpush1.msra.mxu0 0.0
        %439 = vmatprep.subr.mxu0 0.0
        %440 = vmatpush1.msra.mxu0 0.0
        %441 = vmatprep.subr.mxu0 0.0
        %442 = vmatpush1.msra.mxu0 0.0
        %443 = vmatprep.subr.mxu0 0.0
        %444 = vmatpush1.msra.mxu0 0.0
        %445 = vmatprep.subr.mxu0 0.0
        %446 = vmatpush1.msra.mxu0 0.0
        %447 = vmatprep.subr.mxu0 0.0
        %448 = vmatpush1.msra.mxu0 0.0
        %449 = vmatprep.subr.mxu0 0.0
        %450 = vmatpush1.msra.mxu0 0.0
        %451 = vmatprep.subr.mxu0 0.0
        %452 = vmatpush1.msra.mxu0 0.0
        %453 = vmatprep.subr.mxu0 0.0
        %454 = vmatpush1.msra.mxu0 0.0
        %455 = vmatprep.subr.mxu0 0.0
        %456 = vmatpush1.msra.mxu0 0.0
        %457 = vmatprep.subr.mxu0 0.0
        %458 = vmatpush1.msra.mxu0 0.0
        %459 = vmatprep.subr.mxu0 0.0
        %460 = vmatpush1.msra.mxu0 0.0
        %461 = vmatprep.subr.mxu0 0.0
        %462 = vmatpush1.msra.mxu0 0.0
        %463 = vmatprep.subr.mxu0 0.0
        %464 = vmatpush1.msra.mxu0 0.0
        %465 = vmatprep.subr.mxu0 0.0
        %466 = vmatpush1.msra.mxu0 0.0
        %467 = vmatprep.subr.mxu0 0.0
        %468 = vmatpush1.msra.mxu0 0.0
        %469 = vmatprep.subr.mxu0 0.0
        %470 = vmatpush1.msra.mxu0 0.0
        %471 = vmatprep.subr.mxu0 0.0
        %472 = vmatpush1.msra.mxu0 0.0
        %473 = vmatprep.subr.mxu0 0.0
        %474 = vmatpush1.msra.mxu0 0.0
        %475 = vmatprep.subr.mxu0 0.0
        %476 = vmatpush1.msra.mxu0 0.0
        %477 = vmatprep.subr.mxu0 0.0
        %478 = vmatpush1.msra.mxu0 0.0
        %479 = vmatprep.subr.mxu0 0.0
        %480 = vmatpush1.msra.mxu0 0.0
        %481 = vmatprep.subr.mxu0 0.0
        %482 = vmatpush1.msra.mxu0 0.0
        %483 = vmatprep.subr.mxu0 0.0
        %484 = vmatpush1.msra.mxu0 0.0
        %485 = vmatprep.subr.mxu0 0.0
        %486 = vmatpush1.msra.mxu0 0.0
        %487 = vmatprep.subr.mxu0 0.0
        %488 = vmatpush1.msra.mxu0 0.0
        %489 = vmatprep.subr.mxu0 0.0
        %490 = vmatpush1.msra.mxu0 0.0
        %491 = vmatprep.subr.mxu0 0.0
        %492 = vmatpush1.msra.mxu0 0.0
        %493 = vmatprep.subr.mxu0 0.0
        %494 = vmatpush1.msra.mxu0 0.0
        %495 = vmatprep.subr.mxu0 0.0
        %496 = vmatpush1.msra.mxu0 0.0
        %497 = vmatprep.mubr.f32.mxu0 0.0
        %498 = vmatmul.mubr.f32.gmra.mrb[0].mxu0 %v422
        %v499 = vpop.f32.mrb[0].mxu0
        %v500 = vadd.f32 %v418, %v499
        %v501 = vpop.f32.mrb[0].mxu0
        %502 = vmatprep.mubr.f32.mxu0 0.0
        %503 = vmatmul.mubr.f32.gmra.mrb[0].mxu0 %v425
        %v504 = vpop.f32.mrb[0].mxu0
        %v505 = vadd.f32 %v418, %v504
        %v506 = vpop.f32.mrb[0].mxu0
        %507 = vmatprep.mubr.f32.mxu0 0.0
        %508 = vmatmul.mubr.f32.gmra.mrb[0].mxu0 %v428
        %v509 = vpop.f32.mrb[0].mxu0
        %v510 = vadd.f32 %v418, %v509
        %v511 = vpop.f32.mrb[0].mxu0
        %512 = vmatprep.mubr.f32.mxu0 0.0
        %513 = vmatmul.mubr.f32.gmra.mrb[0].mxu0 %v431
        %v514 = vpop.f32.mrb[0].mxu0
        %v515 = vadd.f32 %v418, %v514
        %v516 = vpop.f32.mrb[0].mxu0
        %517 = vdwg.mxu0
        %518 = vst [vmem:[#allocation2] sm:$0xff] %v500
        %519 = vst [vmem:[#allocation2 + $0x8] sm:$0xff] %v505
        %520 = vst [vmem:[#allocation2 + $0x10] sm:$0xff] %v510
        %521 = vst [vmem:[#allocation2 + $0x18] sm:$0xff] %v515
        %v522 = vld [vmem:[%s2] sm:$0xff]
        %v523 = vld [vmem:[%s2 + $0x8] sm:$0xff]
        %v524 = vld [vmem:[%s2 + $0x10] sm:$0xff]
        %v525 = vld [vmem:[%s2 + $0x18] sm:$0xff]
        %v526 = vld [vmem:[#allocation4] sm:$0xff]
        %v527 = vld [vmem:[#allocation5] sm:$0xff]
        %v528 = vld [vmem:[#allocation2] sm:$0xff]
        %vm529 = vcmask 261120
        %v531 = vsel %vm529, %v526, 0
        %533 = vmatprep.subr.mxu0 0.0
        %534 = vmatpush1.msra.mxu0 %v522
        %535 = vmatprep.subr.mxu0 0.0
        %536 = vmatpush1.msra.mxu0 %v523
        %537 = vmatprep.subr.mxu0 0.0
        %538 = vmatpush1.msra.mxu0 %v524
        %539 = vmatprep.subr.mxu0 0.0
        %540 = vmatpush1.msra.mxu0 %v525
        %541 = vmatprep.subr.mxu0 0.0
        %542 = vmatpush1.msra.mxu0 0.0
        %543 = vmatprep.subr.mxu0 0.0
        %544 = vmatpush1.msra.mxu0 0.0
        %545 = vmatprep.subr.mxu0 0.0
        %546 = vmatpush1.msra.mxu0 0.0
        %547 = vmatprep.subr.mxu0 0.0
        %548 = vmatpush1.msra.mxu0 0.0
        %549 = vmatprep.subr.mxu0 0.0
        %550 = vmatpush1.msra.mxu0 0.0
        %551 = vmatprep.subr.mxu0 0.0
        %552 = vmatpush1.msra.mxu0 0.0
        %553 = vmatprep.subr.mxu0 0.0
        %554 = vmatpush1.msra.mxu0 0.0
        %555 = vmatprep.subr.mxu0 0.0
        %556 = vmatpush1.msra.mxu0 0.0
        %557 = vmatprep.subr.mxu0 0.0
        %558 = vmatpush1.msra.mxu0 0.0
        %559 = vmatprep.subr.mxu0 0.0
        %560 = vmatpush1.msra.mxu0 0.0
        %561 = vmatprep.subr.mxu0 0.0
        %562 = vmatpush1.msra.mxu0 0.0
        %563 = vmatprep.subr.mxu0 0.0
        %564 = vmatpush1.msra.mxu0 0.0
        %565 = vmatprep.subr.mxu0 0.0
        %566 = vmatpush1.msra.mxu0 0.0
        %567 = vmatprep.subr.mxu0 0.0
        %568 = vmatpush1.msra.mxu0 0.0
        %569 = vmatprep.subr.mxu0 0.0
        %570 = vmatpush1.msra.mxu0 0.0
        %571 = vmatprep.subr.mxu0 0.0
        %572 = vmatpush1.msra.mxu0 0.0
        %573 = vmatprep.subr.mxu0 0.0
        %574 = vmatpush1.msra.mxu0 0.0
        %575 = vmatprep.subr.mxu0 0.0
        %576 = vmatpush1.msra.mxu0 0.0
        %577 = vmatprep.subr.mxu0 0.0
        %578 = vmatpush1.msra.mxu0 0.0
        %579 = vmatprep.subr.mxu0 0.0
        %580 = vmatpush1.msra.mxu0 0.0
        %581 = vmatprep.subr.mxu0 0.0
        %582 = vmatpush1.msra.mxu0 0.0
        %583 = vmatprep.subr.mxu0 0.0
        %584 = vmatpush1.msra.mxu0 0.0
        %585 = vmatprep.subr.mxu0 0.0
        %586 = vmatpush1.msra.mxu0 0.0
        %587 = vmatprep.subr.mxu0 0.0
        %588 = vmatpush1.msra.mxu0 0.0
        %589 = vmatprep.subr.mxu0 0.0
        %590 = vmatpush1.msra.mxu0 0.0
        %591 = vmatprep.subr.mxu0 0.0
        %592 = vmatpush1.msra.mxu0 0.0
        %593 = vmatprep.subr.mxu0 0.0
        %594 = vmatpush1.msra.mxu0 0.0
        %595 = vmatprep.subr.mxu0 0.0
        %596 = vmatpush1.msra.mxu0 0.0
        %597 = vmatprep.mubr.f32.mxu0 0.0
        %598 = vmatmul.mubr.f32.gmra.mrb[0].mxu0 %v531
        %v599 = vpop.f32.mrb[0].mxu0
        %v600 = vadd.f32 0.0, %v599
        %v601 = vpop.f32.mrb[0].mxu0
        %602 = vdwg.mxu0
        %v603 = vadd.f32 %v528, %v600
        %v604 = vxor.u32 %v603, 2147483648
        %v605 = vmul.f32 %v604, 1.442695
        %v606 = vpow.pop %v605
        %v607 = vadd.f32 %v606, 1.0
        %v608 = vrcp.pop %v607
        %v609 = vmul.f32 1.0, %v608
        %v610 = vtanh.pop %v603
        %612 = vrot.lane.b32.xlu0 %v527, 32
        %v613 = vpop.permute.xlu0 %612
        %v615 = vmul.f32 %v609, %v613
        %617 = vrot.lane.b32.xlu0 %v610, 64
        %v618 = vpop.permute.xlu0 %617
        %v620 = vmul.f32 %v609, %v618
        %622 = vrot.lane.b32.xlu0 %v620, 32
        %v623 = vpop.permute.xlu0 %622
        %v625 = vadd.f32 %v615, %v623
        %v626 = vtanh.pop %v625
        %628 = vrot.lane.b32.xlu0 %v626, 64
        %v629 = vpop.permute.xlu0 %628
        %v631 = vmul.f32 %v609, %v629
        %633 = vrot.lane.b32.xlu0 %v631, 32
        %v634 = vpop.permute.xlu0 %633
        %636 = vst.msk [vmem:[#allocation3] sm:$0xff] %vm529, %v634
        %s637 = scalar_lea.vmem [#allocation2], 8
        %v638 = vld [vmem:[%s637] sm:$0xff]
        %v639 = vsel %vm529, %v634, 0
        %641 = vmatprep.subr.mxu0 0.0
        %642 = vmatpush1.msra.mxu0 %v522
        %643 = vmatprep.subr.mxu0 0.0
        %644 = vmatpush1.msra.mxu0 %v523
        %645 = vmatprep.subr.mxu0 0.0
        %646 = vmatpush1.msra.mxu0 %v524
        %647 = vmatprep.subr.mxu0 0.0
        %648 = vmatpush1.msra.mxu0 %v525
        %649 = vmatprep.subr.mxu0 0.0
        %650 = vmatpush1.msra.mxu0 0.0
        %651 = vmatprep.subr.mxu0 0.0
        %652 = vmatpush1.msra.mxu0 0.0
        %653 = vmatprep.subr.mxu0 0.0
        %654 = vmatpush1.msra.mxu0 0.0
        %655 = vmatprep.subr.mxu0 0.0
        %656 = vmatpush1.msra.mxu0 0.0
        %657 = vmatprep.subr.mxu0 0.0
        %658 = vmatpush1.msra.mxu0 0.0
        %659 = vmatprep.subr.mxu0 0.0
        %660 = vmatpush1.msra.mxu0 0.0
        %661 = vmatprep.subr.mxu0 0.0
        %662 = vmatpush1.msra.mxu0 0.0
        %663 = vmatprep.subr.mxu0 0.0
        %664 = vmatpush1.msra.mxu0 0.0
        %665 = vmatprep.subr.mxu0 0.0
        %666 = vmatpush1.msra.mxu0 0.0
        %667 = vmatprep.subr.mxu0 0.0
        %668 = vmatpush1.msra.mxu0 0.0
        %669 = vmatprep.subr.mxu0 0.0
        %670 = vmatpush1.msra.mxu0 0.0
        %671 = vmatprep.subr.mxu0 0.0
        %672 = vmatpush1.msra.mxu0 0.0
        %673 = vmatprep.subr.mxu0 0.0
        %674 = vmatpush1.msra.mxu0 0.0
        %675 = vmatprep.subr.mxu0 0.0
        %676 = vmatpush1.msra.mxu0 0.0
        %677 = vmatprep.subr.mxu0 0.0
        %678 = vmatpush1.msra.mxu0 0.0
        %679 = vmatprep.subr.mxu0 0.0
        %680 = vmatpush1.msra.mxu0 0.0
        %681 = vmatprep.subr.mxu0 0.0
        %682 = vmatpush1.msra.mxu0 0.0
        %683 = vmatprep.subr.mxu0 0.0
        %684 = vmatpush1.msra.mxu0 0.0
        %685 = vmatprep.subr.mxu0 0.0
        %686 = vmatpush1.msra.mxu0 0.0
        %687 = vmatprep.subr.mxu0 0.0
        %688 = vmatpush1.msra.mxu0 0.0
        %689 = vmatprep.subr.mxu0 0.0
        %690 = vmatpush1.msra.mxu0 0.0
        %691 = vmatprep.subr.mxu0 0.0
        %692 = vmatpush1.msra.mxu0 0.0
        %693 = vmatprep.subr.mxu0 0.0
        %694 = vmatpush1.msra.mxu0 0.0
        %695 = vmatprep.subr.mxu0 0.0
        %696 = vmatpush1.msra.mxu0 0.0
        %697 = vmatprep.subr.mxu0 0.0
        %698 = vmatpush1.msra.mxu0 0.0
        %699 = vmatprep.subr.mxu0 0.0
        %700 = vmatpush1.msra.mxu0 0.0
        %701 = vmatprep.subr.mxu0 0.0
        %702 = vmatpush1.msra.mxu0 0.0
        %703 = vmatprep.subr.mxu0 0.0
        %704 = vmatpush1.msra.mxu0 0.0
        %705 = vmatprep.mubr.f32.mxu0 0.0
        %706 = vmatmul.mubr.f32.gmra.mrb[0].mxu0 %v639
        %v707 = vpop.f32.mrb[0].mxu0
        %v708 = vadd.f32 0.0, %v707
        %v709 = vpop.f32.mrb[0].mxu0
        %710 = vdwg.mxu0
        %v711 = vadd.f32 %v638, %v708
        %v712 = vxor.u32 %v711, 2147483648
        %v713 = vmul.f32 %v712, 1.442695
        %v714 = vpow.pop %v713
        %v715 = vadd.f32 %v714, 1.0
        %v716 = vrcp.pop %v715
        %v717 = vmul.f32 1.0, %v716
        %v718 = vtanh.pop %v711
        %v719 = vmul.f32 %v717, %v625
        %721 = vrot.lane.b32.xlu0 %v718, 64
        %v722 = vpop.permute.xlu0 %721
        %v724 = vmul.f32 %v717, %v722
        %726 = vrot.lane.b32.xlu0 %v724, 32
        %v727 = vpop.permute.xlu0 %726
        %v729 = vadd.f32 %v719, %v727
        %v730 = vtanh.pop %v729
        %732 = vrot.lane.b32.xlu0 %v730, 64
        %v733 = vpop.permute.xlu0 %732
        %v735 = vmul.f32 %v717, %v733
        %737 = vrot.lane.b32.xlu0 %v735, 32
        %v738 = vpop.permute.xlu0 %737
        %s740 = scalar_lea.vmem [#allocation3], 8
        %741 = vst.msk [vmem:[%s740] sm:$0xff] %vm529, %v738
        %s742 = scalar_lea.vmem [#allocation2], 16
        %v743 = vld [vmem:[%s742] sm:$0xff]
        %v744 = vsel %vm529, %v738, 0
        %746 = vmatprep.subr.mxu0 0.0
        %747 = vmatpush1.msra.mxu0 %v522
        %748 = vmatprep.subr.mxu0 0.0
        %749 = vmatpush1.msra.mxu0 %v523
        %750 = vmatprep.subr.mxu0 0.0
        %751 = vmatpush1.msra.mxu0 %v524
        %752 = vmatprep.subr.mxu0 0.0
        %753 = vmatpush1.msra.mxu0 %v525
        %754 = vmatprep.subr.mxu0 0.0
        %755 = vmatpush1.msra.mxu0 0.0
        %756 = vmatprep.subr.mxu0 0.0
        %757 = vmatpush1.msra.mxu0 0.0
        %758 = vmatprep.subr.mxu0 0.0
        %759 = vmatpush1.msra.mxu0 0.0
        %760 = vmatprep.subr.mxu0 0.0
        %761 = vmatpush1.msra.mxu0 0.0
        %762 = vmatprep.subr.mxu0 0.0
        %763 = vmatpush1.msra.mxu0 0.0
        %764 = vmatprep.subr.mxu0 0.0
        %765 = vmatpush1.msra.mxu0 0.0
        %766 = vmatprep.subr.mxu0 0.0
        %767 = vmatpush1.msra.mxu0 0.0
        %768 = vmatprep.subr.mxu0 0.0
        %769 = vmatpush1.msra.mxu0 0.0
        %770 = vmatprep.subr.mxu0 0.0
        %771 = vmatpush1.msra.mxu0 0.0
        %772 = vmatprep.subr.mxu0 0.0
        %773 = vmatpush1.msra.mxu0 0.0
        %774 = vmatprep.subr.mxu0 0.0
        %775 = vmatpush1.msra.mxu0 0.0
        %776 = vmatprep.subr.mxu0 0.0
        %777 = vmatpush1.msra.mxu0 0.0
        %778 = vmatprep.subr.mxu0 0.0
        %779 = vmatpush1.msra.mxu0 0.0
        %780 = vmatprep.subr.mxu0 0.0
        %781 = vmatpush1.msra.mxu0 0.0
        %782 = vmatprep.subr.mxu0 0.0
        %783 = vmatpush1.msra.mxu0 0.0
        %784 = vmatprep.subr.mxu0 0.0
        %785 = vmatpush1.msra.mxu0 0.0
        %786 = vmatprep.subr.mxu0 0.0
        %787 = vmatpush1.msra.mxu0 0.0
        %788 = vmatprep.subr.mxu0 0.0
        %789 = vmatpush1.msra.mxu0 0.0
        %790 = vmatprep.subr.mxu0 0.0
        %791 = vmatpush1.msra.mxu0 0.0
        %792 = vmatprep.subr.mxu0 0.0
        %793 = vmatpush1.msra.mxu0 0.0
        %794 = vmatprep.subr.mxu0 0.0
        %795 = vmatpush1.msra.mxu0 0.0
        %796 = vmatprep.subr.mxu0 0.0
        %797 = vmatpush1.msra.mxu0 0.0
        %798 = vmatprep.subr.mxu0 0.0
        %799 = vmatpush1.msra.mxu0 0.0
        %800 = vmatprep.subr.mxu0 0.0
        %801 = vmatpush1.msra.mxu0 0.0
        %802 = vmatprep.subr.mxu0 0.0
        %803 = vmatpush1.msra.mxu0 0.0
        %804 = vmatprep.subr.mxu0 0.0
        %805 = vmatpush1.msra.mxu0 0.0
        %806 = vmatprep.subr.mxu0 0.0
        %807 = vmatpush1.msra.mxu0 0.0
        %808 = vmatprep.subr.mxu0 0.0
        %809 = vmatpush1.msra.mxu0 0.0
        %810 = vmatprep.mubr.f32.mxu0 0.0
        %811 = vmatmul.mubr.f32.gmra.mrb[0].mxu0 %v744
        %v812 = vpop.f32.mrb[0].mxu0
        %v813 = vadd.f32 0.0, %v812
        %v814 = vpop.f32.mrb[0].mxu0
        %815 = vdwg.mxu0
        %v816 = vadd.f32 %v743, %v813
        %v817 = vxor.u32 %v816, 2147483648
        %v818 = vmul.f32 %v817, 1.442695
        %v819 = vpow.pop %v818
        %v820 = vadd.f32 %v819, 1.0
        %v821 = vrcp.pop %v820
        %v822 = vmul.f32 1.0, %v821
        %v823 = vtanh.pop %v816
        %v824 = vmul.f32 %v822, %v729
        %826 = vrot.lane.b32.xlu0 %v823, 64
        %v827 = vpop.permute.xlu0 %826
        %v829 = vmul.f32 %v822, %v827
        %831 = vrot.lane.b32.xlu0 %v829, 32
        %v832 = vpop.permute.xlu0 %831
        %v834 = vadd.f32 %v824, %v832
        %v835 = vtanh.pop %v834
        %837 = vrot.lane.b32.xlu0 %v835, 64
        %v838 = vpop.permute.xlu0 %837
        %v840 = vmul.f32 %v822, %v838
        %842 = vrot.lane.b32.xlu0 %v840, 32
        %v843 = vpop.permute.xlu0 %842
        %s845 = scalar_lea.vmem [#allocation3], 16
        %846 = vst.msk [vmem:[%s845] sm:$0xff] %vm529, %v843
        %s847 = scalar_lea.vmem [#allocation2], 24
        %v848 = vld [vmem:[%s847] sm:$0xff]
        %v849 = vsel %vm529, %v843, 0
        %851 = vmatprep.subr.mxu0 0.0
        %852 = vmatpush1.msra.mxu0 %v522
        %853 = vmatprep.subr.mxu0 0.0
        %854 = vmatpush1.msra.mxu0 %v523
        %855 = vmatprep.subr.mxu0 0.0
        %856 = vmatpush1.msra.mxu0 %v524
        %857 = vmatprep.subr.mxu0 0.0
        %858 = vmatpush1.msra.mxu0 %v525
        %859 = vmatprep.subr.mxu0 0.0
        %860 = vmatpush1.msra.mxu0 0.0
        %861 = vmatprep.subr.mxu0 0.0
        %862 = vmatpush1.msra.mxu0 0.0
        %863 = vmatprep.subr.mxu0 0.0
        %864 = vmatpush1.msra.mxu0 0.0
        %865 = vmatprep.subr.mxu0 0.0
        %866 = vmatpush1.msra.mxu0 0.0
        %867 = vmatprep.subr.mxu0 0.0
        %868 = vmatpush1.msra.mxu0 0.0
        %869 = vmatprep.subr.mxu0 0.0
        %870 = vmatpush1.msra.mxu0 0.0
        %871 = vmatprep.subr.mxu0 0.0
        %872 = vmatpush1.msra.mxu0 0.0
        %873 = vmatprep.subr.mxu0 0.0
        %874 = vmatpush1.msra.mxu0 0.0
        %875 = vmatprep.subr.mxu0 0.0
        %876 = vmatpush1.msra.mxu0 0.0
        %877 = vmatprep.subr.mxu0 0.0
        %878 = vmatpush1.msra.mxu0 0.0
        %879 = vmatprep.subr.mxu0 0.0
        %880 = vmatpush1.msra.mxu0 0.0
        %881 = vmatprep.subr.mxu0 0.0
        %882 = vmatpush1.msra.mxu0 0.0
        %883 = vmatprep.subr.mxu0 0.0
        %884 = vmatpush1.msra.mxu0 0.0
        %885 = vmatprep.subr.mxu0 0.0
        %886 = vmatpush1.msra.mxu0 0.0
        %887 = vmatprep.subr.mxu0 0.0
        %888 = vmatpush1.msra.mxu0 0.0
        %889 = vmatprep.subr.mxu0 0.0
        %890 = vmatpush1.msra.mxu0 0.0
        %891 = vmatprep.subr.mxu0 0.0
        %892 = vmatpush1.msra.mxu0 0.0
        %893 = vmatprep.subr.mxu0 0.0
        %894 = vmatpush1.msra.mxu0 0.0
        %895 = vmatprep.subr.mxu0 0.0
        %896 = vmatpush1.msra.mxu0 0.0
        %897 = vmatprep.subr.mxu0 0.0
        %898 = vmatpush1.msra.mxu0 0.0
        %899 = vmatprep.subr.mxu0 0.0
        %900 = vmatpush1.msra.mxu0 0.0
        %901 = vmatprep.subr.mxu0 0.0
        %902 = vmatpush1.msra.mxu0 0.0
        %903 = vmatprep.subr.mxu0 0.0
        %904 = vmatpush1.msra.mxu0 0.0
        %905 = vmatprep.subr.mxu0 0.0
        %906 = vmatpush1.msra.mxu0 0.0
        %907 = vmatprep.subr.mxu0 0.0
        %908 = vmatpush1.msra.mxu0 0.0
        %909 = vmatprep.subr.mxu0 0.0
        %910 = vmatpush1.msra.mxu0 0.0
        %911 = vmatprep.subr.mxu0 0.0
        %912 = vmatpush1.msra.mxu0 0.0
        %913 = vmatprep.subr.mxu0 0.0
        %914 = vmatpush1.msra.mxu0 0.0
        %915 = vmatprep.mubr.f32.mxu0 0.0
        %916 = vmatmul.mubr.f32.gmra.mrb[0].mxu0 %v849
        %v917 = vpop.f32.mrb[0].mxu0
        %v918 = vadd.f32 0.0, %v917
        %v919 = vpop.f32.mrb[0].mxu0
        %920 = vdwg.mxu0
        %v921 = vadd.f32 %v848, %v918
        %v922 = vxor.u32 %v921, 2147483648
        %v923 = vmul.f32 %v922, 1.442695
        %v924 = vpow.pop %v923
        %v925 = vadd.f32 %v924, 1.0
        %v926 = vrcp.pop %v925
        %v927 = vmul.f32 1.0, %v926
        %v928 = vtanh.pop %v921
        %v929 = vmul.f32 %v927, %v834
        %931 = vrot.lane.b32.xlu0 %v928, 64
        %v932 = vpop.permute.xlu0 %931
        %v934 = vmul.f32 %v927, %v932
        %936 = vrot.lane.b32.xlu0 %v934, 32
        %v937 = vpop.permute.xlu0 %936
        %v939 = vadd.f32 %v929, %v937
        %v940 = vtanh.pop %v939
        %942 = vrot.lane.b32.xlu0 %v940, 64
        %v943 = vpop.permute.xlu0 %942
        %v945 = vmul.f32 %v927, %v943
        %947 = vrot.lane.b32.xlu0 %v945, 32
        %v948 = vpop.permute.xlu0 %947
        %s950 = scalar_lea.vmem [#allocation3], 24
        %951 = vst.msk [vmem:[%s950] sm:$0xff] %vm529, %v948
        %952 = vst.msk [vmem:[#allocation4] sm:$0xff] %vm529, %v948
        %954 = vrot.lane.b32.xlu0 %v939, 96
        %v955 = vpop.permute.xlu0 %954
        %957 = vst.msk [vmem:[#allocation5] sm:$0xff] %vm529, %v955
        %v958 = vld [vmem:[#allocation3] sm:$0xff]
        %v959 = vld [vmem:[#allocation3 + $0x8] sm:$0xff]
        %v960 = vld [vmem:[#allocation3 + $0x10] sm:$0xff]
        %v961 = vld [vmem:[#allocation3 + $0x18] sm:$0xff]
        %v962 = vld [vmem:[#allocation12] sm:$0xff]
        %v963 = vld [vmem:[#allocation12 + $0x8] sm:$0xff]
        %v964 = vld [vmem:[#allocation12 + $0x10] sm:$0xff]
        %v965 = vld [vmem:[#allocation12 + $0x18] sm:$0xff]
        %v966 = vld [vmem:[%s6] sm:$0x1]
        %v968 = vlaneseq
        %v969 = vshrl.u32 %v968, 7
        %v970 = vsub.s32 0, %v969
        %v971 = vrot.slane %v966, %v970
        %v974 = vsel %vm529, %v958, 0
        %v977 = vsel %vm529, %v959, 0
        %v980 = vsel %vm529, %v960, 0
        %v983 = vsel %vm529, %v961, 0
        %985 = vmatprep.subr.mxu0 0.0
        %986 = vmatpush1.msra.mxu0 %v962
        %987 = vmatprep.subr.mxu0 0.0
        %988 = vmatpush1.msra.mxu0 %v963
        %989 = vmatprep.subr.mxu0 0.0
        %990 = vmatpush1.msra.mxu0 %v964
        %991 = vmatprep.subr.mxu0 0.0
        %992 = vmatpush1.msra.mxu0 %v965
        %993 = vmatprep.subr.mxu0 0.0
        %994 = vmatpush1.msra.mxu0 0.0
        %995 = vmatprep.subr.mxu0 0.0
        %996 = vmatpush1.msra.mxu0 0.0
        %997 = vmatprep.subr.mxu0 0.0
        %998 = vmatpush1.msra.mxu0 0.0
        %999 = vmatprep.subr.mxu0 0.0
        %1000 = vmatpush1.msra.mxu0 0.0
        %1001 = vmatprep.subr.mxu0 0.0
        %1002 = vmatpush1.msra.mxu0 0.0
        %1003 = vmatprep.subr.mxu0 0.0
        %1004 = vmatpush1.msra.mxu0 0.0
        %1005 = vmatprep.subr.mxu0 0.0
        %1006 = vmatpush1.msra.mxu0 0.0
        %1007 = vmatprep.subr.mxu0 0.0
        %1008 = vmatpush1.msra.mxu0 0.0
        %1009 = vmatprep.subr.mxu0 0.0
        %1010 = vmatpush1.msra.mxu0 0.0
        %1011 = vmatprep.subr.mxu0 0.0
        %1012 = vmatpush1.msra.mxu0 0.0
        %1013 = vmatprep.subr.mxu0 0.0
        %1014 = vmatpush1.msra.mxu0 0.0
        %1015 = vmatprep.subr.mxu0 0.0
        %1016 = vmatpush1.msra.mxu0 0.0
        %1017 = vmatprep.subr.mxu0 0.0
        %1018 = vmatpush1.msra.mxu0 0.0
        %1019 = vmatprep.subr.mxu0 0.0
        %1020 = vmatpush1.msra.mxu0 0.0
        %1021 = vmatprep.subr.mxu0 0.0
        %1022 = vmatpush1.msra.mxu0 0.0
        %1023 = vmatprep.subr.mxu0 0.0
        %1024 = vmatpush1.msra.mxu0 0.0
        %1025 = vmatprep.subr.mxu0 0.0
        %1026 = vmatpush1.msra.mxu0 0.0
        %1027 = vmatprep.subr.mxu0 0.0
        %1028 = vmatpush1.msra.mxu0 0.0
        %1029 = vmatprep.subr.mxu0 0.0
        %1030 = vmatpush1.msra.mxu0 0.0
        %1031 = vmatprep.subr.mxu0 0.0
        %1032 = vmatpush1.msra.mxu0 0.0
        %1033 = vmatprep.subr.mxu0 0.0
        %1034 = vmatpush1.msra.mxu0 0.0
        %1035 = vmatprep.subr.mxu0 0.0
        %1036 = vmatpush1.msra.mxu0 0.0
        %1037 = vmatprep.subr.mxu0 0.0
        %1038 = vmatpush1.msra.mxu0 0.0
        %1039 = vmatprep.subr.mxu0 0.0
        %1040 = vmatpush1.msra.mxu0 0.0
        %1041 = vmatprep.subr.mxu0 0.0
        %1042 = vmatpush1.msra.mxu0 0.0
        %1043 = vmatprep.subr.mxu0 0.0
        %1044 = vmatpush1.msra.mxu0 0.0
        %1045 = vmatprep.subr.mxu0 0.0
        %1046 = vmatpush1.msra.mxu0 0.0
        %1047 = vmatprep.subr.mxu0 0.0
        %1048 = vmatpush1.msra.mxu0 0.0
        %1049 = vmatprep.mubr.f32.mxu0 0.0
        %1050 = vmatmul.mubr.f32.gmra.mrb[0].mxu0 %v974
        %v1051 = vpop.f32.mrb[0].mxu0
        %v1052 = vadd.f32 %v971, %v1051
        %v1053 = vpop.f32.mrb[0].mxu0
        %1054 = vmatprep.mubr.f32.mxu0 0.0
        %1055 = vmatmul.mubr.f32.gmra.mrb[0].mxu0 %v977
        %v1056 = vpop.f32.mrb[0].mxu0
        %v1057 = vadd.f32 %v971, %v1056
        %v1058 = vpop.f32.mrb[0].mxu0
        %1059 = vmatprep.mubr.f32.mxu0 0.0
        %1060 = vmatmul.mubr.f32.gmra.mrb[0].mxu0 %v980
        %v1061 = vpop.f32.mrb[0].mxu0
        %v1062 = vadd.f32 %v971, %v1061
        %v1063 = vpop.f32.mrb[0].mxu0
        %1064 = vmatprep.mubr.f32.mxu0 0.0
        %1065 = vmatmul.mubr.f32.gmra.mrb[0].mxu0 %v983
        %v1066 = vpop.f32.mrb[0].mxu0
        %v1067 = vadd.f32 %v971, %v1066
        %v1068 = vpop.f32.mrb[0].mxu0
        %1069 = vdwg.mxu0
        %1070 = vst [vmem:[#allocation2] sm:$0xff] %v1052
        %1071 = vst [vmem:[#allocation2 + $0x8] sm:$0xff] %v1057
        %1072 = vst [vmem:[#allocation2 + $0x10] sm:$0xff] %v1062
        %1073 = vst [vmem:[#allocation2 + $0x18] sm:$0xff] %v1067
        %v1074 = vld [vmem:[#allocation13] sm:$0xff]
        %v1075 = vld [vmem:[#allocation13 + $0x8] sm:$0xff]
        %v1076 = vld [vmem:[#allocation13 + $0x10] sm:$0xff]
        %v1077 = vld [vmem:[#allocation13 + $0x18] sm:$0xff]
        %s1078 = scalar_lea.vmem [#allocation4], 8
        %v1079 = vld [vmem:[%s1078] sm:$0xff]
        %s1080 = scalar_lea.vmem [#allocation5], 8
        %v1081 = vld [vmem:[%s1080] sm:$0xff]
        %v1082 = vld [vmem:[#allocation2] sm:$0xff]
        %v1084 = vsel %vm529, %v1079, 0
        %1086 = vmatprep.subr.mxu0 0.0
        %1087 = vmatpush1.msra.mxu0 %v1074
        %1088 = vmatprep.subr.mxu0 0.0
        %1089 = vmatpush1.msra.mxu0 %v1075
        %1090 = vmatprep.subr.mxu0 0.0
        %1091 = vmatpush1.msra.mxu0 %v1076
        %1092 = vmatprep.subr.mxu0 0.0
        %1093 = vmatpush1.msra.mxu0 %v1077
        %1094 = vmatprep.subr.mxu0 0.0
        %1095 = vmatpush1.msra.mxu0 0.0
        %1096 = vmatprep.subr.mxu0 0.0
        %1097 = vmatpush1.msra.mxu0 0.0
        %1098 = vmatprep.subr.mxu0 0.0
        %1099 = vmatpush1.msra.mxu0 0.0
        %1100 = vmatprep.subr.mxu0 0.0
        %1101 = vmatpush1.msra.mxu0 0.0
        %1102 = vmatprep.subr.mxu0 0.0
        %1103 = vmatpush1.msra.mxu0 0.0
        %1104 = vmatprep.subr.mxu0 0.0
        %1105 = vmatpush1.msra.mxu0 0.0
        %1106 = vmatprep.subr.mxu0 0.0
        %1107 = vmatpush1.msra.mxu0 0.0
        %1108 = vmatprep.subr.mxu0 0.0
        %1109 = vmatpush1.msra.mxu0 0.0
        %1110 = vmatprep.subr.mxu0 0.0
        %1111 = vmatpush1.msra.mxu0 0.0
        %1112 = vmatprep.subr.mxu0 0.0
        %1113 = vmatpush1.msra.mxu0 0.0
        %1114 = vmatprep.subr.mxu0 0.0
        %1115 = vmatpush1.msra.mxu0 0.0
        %1116 = vmatprep.subr.mxu0 0.0
        %1117 = vmatpush1.msra.mxu0 0.0
        %1118 = vmatprep.subr.mxu0 0.0
        %1119 = vmatpush1.msra.mxu0 0.0
        %1120 = vmatprep.subr.mxu0 0.0
        %1121 = vmatpush1.msra.mxu0 0.0
        %1122 = vmatprep.subr.mxu0 0.0
        %1123 = vmatpush1.msra.mxu0 0.0
        %1124 = vmatprep.subr.mxu0 0.0
        %1125 = vmatpush1.msra.mxu0 0.0
        %1126 = vmatprep.subr.mxu0 0.0
        %1127 = vmatpush1.msra.mxu0 0.0
        %1128 = vmatprep.subr.mxu0 0.0
        %1129 = vmatpush1.msra.mxu0 0.0
        %1130 = vmatprep.subr.mxu0 0.0
        %1131 = vmatpush1.msra.mxu0 0.0
        %1132 = vmatprep.subr.mxu0 0.0
        %1133 = vmatpush1.msra.mxu0 0.0
        %1134 = vmatprep.subr.mxu0 0.0
        %1135 = vmatpush1.msra.mxu0 0.0
        %1136 = vmatprep.subr.mxu0 0.0
        %1137 = vmatpush1.msra.mxu0 0.0
        %1138 = vmatprep.subr.mxu0 0.0
        %1139 = vmatpush1.msra.mxu0 0.0
        %1140 = vmatprep.subr.mxu0 0.0
        %1141 = vmatpush1.msra.mxu0 0.0
        %1142 = vmatprep.subr.mxu0 0.0
        %1143 = vmatpush1.msra.mxu0 0.0
        %1144 = vmatprep.subr.mxu0 0.0
        %1145 = vmatpush1.msra.mxu0 0.0
        %1146 = vmatprep.subr.mxu0 0.0
        %1147 = vmatpush1.msra.mxu0 0.0
        %1148 = vmatprep.subr.mxu0 0.0
        %1149 = vmatpush1.msra.mxu0 0.0
        %1150 = vmatprep.mubr.f32.mxu0 0.0
        %1151 = vmatmul.mubr.f32.gmra.mrb[0].mxu0 %v1084
        %v1152 = vpop.f32.mrb[0].mxu0
        %v1153 = vadd.f32 0.0, %v1152
        %v1154 = vpop.f32.mrb[0].mxu0
        %1155 = vdwg.mxu0
        %v1156 = vadd.f32 %v1082, %v1153
        %v1157 = vxor.u32 %v1156, 2147483648
        %v1158 = vmul.f32 %v1157, 1.442695
        %v1159 = vpow.pop %v1158
        %v1160 = vadd.f32 %v1159, 1.0
        %v1161 = vrcp.pop %v1160
        %v1162 = vmul.f32 1.0, %v1161
        %v1163 = vtanh.pop %v1156
        %1165 = vrot.lane.b32.xlu0 %v1081, 32
        %v1166 = vpop.permute.xlu0 %1165
        %v1168 = vmul.f32 %v1162, %v1166
        %1170 = vrot.lane.b32.xlu0 %v1163, 64
        %v1171 = vpop.permute.xlu0 %1170
        %v1173 = vmul.f32 %v1162, %v1171
        %1175 = vrot.lane.b32.xlu0 %v1173, 32
        %v1176 = vpop.permute.xlu0 %1175
        %v1178 = vadd.f32 %v1168, %v1176
        %v1179 = vtanh.pop %v1178
        %1181 = vrot.lane.b32.xlu0 %v1179, 64
        %v1182 = vpop.permute.xlu0 %1181
        %v1184 = vmul.f32 %v1162, %v1182
        %1186 = vrot.lane.b32.xlu0 %v1184, 32
        %v1187 = vpop.permute.xlu0 %1186
        %1189 = vst.msk [vmem:[#allocation3] sm:$0xff] %vm529, %v1187
        %v1190 = vld [vmem:[%s637] sm:$0xff]
        %v1191 = vsel %vm529, %v1187, 0
        %1193 = vmatprep.subr.mxu0 0.0
        %1194 = vmatpush1.msra.mxu0 %v1074
        %1195 = vmatprep.subr.mxu0 0.0
        %1196 = vmatpush1.msra.mxu0 %v1075
        %1197 = vmatprep.subr.mxu0 0.0
        %1198 = vmatpush1.msra.mxu0 %v1076
        %1199 = vmatprep.subr.mxu0 0.0
        %1200 = vmatpush1.msra.mxu0 %v1077
        %1201 = vmatprep.subr.mxu0 0.0
        %1202 = vmatpush1.msra.mxu0 0.0
        %1203 = vmatprep.subr.mxu0 0.0
        %1204 = vmatpush1.msra.mxu0 0.0
        %1205 = vmatprep.subr.mxu0 0.0
        %1206 = vmatpush1.msra.mxu0 0.0
        %1207 = vmatprep.subr.mxu0 0.0
        %1208 = vmatpush1.msra.mxu0 0.0
        %1209 = vmatprep.subr.mxu0 0.0
        %1210 = vmatpush1.msra.mxu0 0.0
        %1211 = vmatprep.subr.mxu0 0.0
        %1212 = vmatpush1.msra.mxu0 0.0
        %1213 = vmatprep.subr.mxu0 0.0
        %1214 = vmatpush1.msra.mxu0 0.0
        %1215 = vmatprep.subr.mxu0 0.0
        %1216 = vmatpush1.msra.mxu0 0.0
        %1217 = vmatprep.subr.mxu0 0.0
        %1218 = vmatpush1.msra.mxu0 0.0
        %1219 = vmatprep.subr.mxu0 0.0
        %1220 = vmatpush1.msra.mxu0 0.0
        %1221 = vmatprep.subr.mxu0 0.0
        %1222 = vmatpush1.msra.mxu0 0.0
        %1223 = vmatprep.subr.mxu0 0.0
        %1224 = vmatpush1.msra.mxu0 0.0
        %1225 = vmatprep.subr.mxu0 0.0
        %1226 = vmatpush1.msra.mxu0 0.0
        %1227 = vmatprep.subr.mxu0 0.0
        %1228 = vmatpush1.msra.mxu0 0.0
        %1229 = vmatprep.subr.mxu0 0.0
        %1230 = vmatpush1.msra.mxu0 0.0
        %1231 = vmatprep.subr.mxu0 0.0
        %1232 = vmatpush1.msra.mxu0 0.0
        %1233 = vmatprep.subr.mxu0 0.0
        %1234 = vmatpush1.msra.mxu0 0.0
        %1235 = vmatprep.subr.mxu0 0.0
        %1236 = vmatpush1.msra.mxu0 0.0
        %1237 = vmatprep.subr.mxu0 0.0
        %1238 = vmatpush1.msra.mxu0 0.0
        %1239 = vmatprep.subr.mxu0 0.0
        %1240 = vmatpush1.msra.mxu0 0.0
        %1241 = vmatprep.subr.mxu0 0.0
        %1242 = vmatpush1.msra.mxu0 0.0
        %1243 = vmatprep.subr.mxu0 0.0
        %1244 = vmatpush1.msra.mxu0 0.0
        %1245 = vmatprep.subr.mxu0 0.0
        %1246 = vmatpush1.msra.mxu0 0.0
        %1247 = vmatprep.subr.mxu0 0.0
        %1248 = vmatpush1.msra.mxu0 0.0
        %1249 = vmatprep.subr.mxu0 0.0
        %1250 = vmatpush1.msra.mxu0 0.0
        %1251 = vmatprep.subr.mxu0 0.0
        %1252 = vmatpush1.msra.mxu0 0.0
        %1253 = vmatprep.subr.mxu0 0.0
        %1254 = vmatpush1.msra.mxu0 0.0
        %1255 = vmatprep.subr.mxu0 0.0
        %1256 = vmatpush1.msra.mxu0 0.0
        %1257 = vmatprep.mubr.f32.mxu0 0.0
        %1258 = vmatmul.mubr.f32.gmra.mrb[0].mxu0 %v1191
        %v1259 = vpop.f32.mrb[0].mxu0
        %v1260 = vadd.f32 0.0, %v1259
        %v1261 = vpop.f32.mrb[0].mxu0
        %1262 = vdwg.mxu0
        %v1263 = vadd.f32 %v1190, %v1260
        %v1264 = vxor.u32 %v1263, 2147483648
        %v1265 = vmul.f32 %v1264, 1.442695
        %v1266 = vpow.pop %v1265
        %v1267 = vadd.f32 %v1266, 1.0
        %v1268 = vrcp.pop %v1267
        %v1269 = vmul.f32 1.0, %v1268
        %v1270 = vtanh.pop %v1263
        %v1271 = vmul.f32 %v1269, %v1178
        %1273 = vrot.lane.b32.xlu0 %v1270, 64
        %v1274 = vpop.permute.xlu0 %1273
        %v1276 = vmul.f32 %v1269, %v1274
        %1278 = vrot.lane.b32.xlu0 %v1276, 32
        %v1279 = vpop.permute.xlu0 %1278
        %v1281 = vadd.f32 %v1271, %v1279
        %v1282 = vtanh.pop %v1281
        %1284 = vrot.lane.b32.xlu0 %v1282, 64
        %v1285 = vpop.permute.xlu0 %1284
        %v1287 = vmul.f32 %v1269, %v1285
        %1289 = vrot.lane.b32.xlu0 %v1287, 32
        %v1290 = vpop.permute.xlu0 %1289
        %1292 = vst.msk [vmem:[%s740] sm:$0xff] %vm529, %v1290
        %v1293 = vld [vmem:[%s742] sm:$0xff]
        %v1294 = vsel %vm529, %v1290, 0
        %1296 = vmatprep.subr.mxu0 0.0
        %1297 = vmatpush1.msra.mxu0 %v1074
        %1298 = vmatprep.subr.mxu0 0.0
        %1299 = vmatpush1.msra.mxu0 %v1075
        %1300 = vmatprep.subr.mxu0 0.0
        %1301 = vmatpush1.msra.mxu0 %v1076
        %1302 = vmatprep.subr.mxu0 0.0
        %1303 = vmatpush1.msra.mxu0 %v1077
        %1304 = vmatprep.subr.mxu0 0.0
        %1305 = vmatpush1.msra.mxu0 0.0
        %1306 = vmatprep.subr.mxu0 0.0
        %1307 = vmatpush1.msra.mxu0 0.0
        %1308 = vmatprep.subr.mxu0 0.0
        %1309 = vmatpush1.msra.mxu0 0.0
        %1310 = vmatprep.subr.mxu0 0.0
        %1311 = vmatpush1.msra.mxu0 0.0
        %1312 = vmatprep.subr.mxu0 0.0
        %1313 = vmatpush1.msra.mxu0 0.0
        %1314 = vmatprep.subr.mxu0 0.0
        %1315 = vmatpush1.msra.mxu0 0.0
        %1316 = vmatprep.subr.mxu0 0.0
        %1317 = vmatpush1.msra.mxu0 0.0
        %1318 = vmatprep.subr.mxu0 0.0
        %1319 = vmatpush1.msra.mxu0 0.0
        %1320 = vmatprep.subr.mxu0 0.0
        %1321 = vmatpush1.msra.mxu0 0.0
        %1322 = vmatprep.subr.mxu0 0.0
        %1323 = vmatpush1.msra.mxu0 0.0
        %1324 = vmatprep.subr.mxu0 0.0
        %1325 = vmatpush1.msra.mxu0 0.0
        %1326 = vmatprep.subr.mxu0 0.0
        %1327 = vmatpush1.msra.mxu0 0.0
        %1328 = vmatprep.subr.mxu0 0.0
        %1329 = vmatpush1.msra.mxu0 0.0
        %1330 = vmatprep.subr.mxu0 0.0
        %1331 = vmatpush1.msra.mxu0 0.0
        %1332 = vmatprep.subr.mxu0 0.0
        %1333 = vmatpush1.msra.mxu0 0.0
        %1334 = vmatprep.subr.mxu0 0.0
        %1335 = vmatpush1.msra.mxu0 0.0
        %1336 = vmatprep.subr.mxu0 0.0
        %1337 = vmatpush1.msra.mxu0 0.0
        %1338 = vmatprep.subr.mxu0 0.0
        %1339 = vmatpush1.msra.mxu0 0.0
        %1340 = vmatprep.subr.mxu0 0.0
        %1341 = vmatpush1.msra.mxu0 0.0
        %1342 = vmatprep.subr.mxu0 0.0
        %1343 = vmatpush1.msra.mxu0 0.0
        %1344 = vmatprep.subr.mxu0 0.0
        %1345 = vmatpush1.msra.mxu0 0.0
        %1346 = vmatprep.subr.mxu0 0.0
        %1347 = vmatpush1.msra.mxu0 0.0
        %1348 = vmatprep.subr.mxu0 0.0
        %1349 = vmatpush1.msra.mxu0 0.0
        %1350 = vmatprep.subr.mxu0 0.0
        %1351 = vmatpush1.msra.mxu0 0.0
        %1352 = vmatprep.subr.mxu0 0.0
        %1353 = vmatpush1.msra.mxu0 0.0
        %1354 = vmatprep.subr.mxu0 0.0
        %1355 = vmatpush1.msra.mxu0 0.0
        %1356 = vmatprep.subr.mxu0 0.0
        %1357 = vmatpush1.msra.mxu0 0.0
        %1358 = vmatprep.subr.mxu0 0.0
        %1359 = vmatpush1.msra.mxu0 0.0
        %1360 = vmatprep.mubr.f32.mxu0 0.0
        %1361 = vmatmul.mubr.f32.gmra.mrb[0].mxu0 %v1294
        %v1362 = vpop.f32.mrb[0].mxu0
        %v1363 = vadd.f32 0.0, %v1362
        %v1364 = vpop.f32.mrb[0].mxu0
        %1365 = vdwg.mxu0
        %v1366 = vadd.f32 %v1293, %v1363
        %v1367 = vxor.u32 %v1366, 2147483648
        %v1368 = vmul.f32 %v1367, 1.442695
        %v1369 = vpow.pop %v1368
        %v1370 = vadd.f32 %v1369, 1.0
        %v1371 = vrcp.pop %v1370
        %v1372 = vmul.f32 1.0, %v1371
        %v1373 = vtanh.pop %v1366
        %v1374 = vmul.f32 %v1372, %v1281
        %1376 = vrot.lane.b32.xlu0 %v1373, 64
        %v1377 = vpop.permute.xlu0 %1376
        %v1379 = vmul.f32 %v1372, %v1377
        %1381 = vrot.lane.b32.xlu0 %v1379, 32
        %v1382 = vpop.permute.xlu0 %1381
        %v1384 = vadd.f32 %v1374, %v1382
        %v1385 = vtanh.pop %v1384
        %1387 = vrot.lane.b32.xlu0 %v1385, 64
        %v1388 = vpop.permute.xlu0 %1387
        %v1390 = vmul.f32 %v1372, %v1388
        %1392 = vrot.lane.b32.xlu0 %v1390, 32
        %v1393 = vpop.permute.xlu0 %1392
        %1395 = vst.msk [vmem:[%s845] sm:$0xff] %vm529, %v1393
        %v1396 = vld [vmem:[%s847] sm:$0xff]
        %v1397 = vsel %vm529, %v1393, 0
        %1399 = vmatprep.subr.mxu0 0.0
        %1400 = vmatpush1.msra.mxu0 %v1074
        %1401 = vmatprep.subr.mxu0 0.0
        %1402 = vmatpush1.msra.mxu0 %v1075
        %1403 = vmatprep.subr.mxu0 0.0
        %1404 = vmatpush1.msra.mxu0 %v1076
        %1405 = vmatprep.subr.mxu0 0.0
        %1406 = vmatpush1.msra.mxu0 %v1077
        %1407 = vmatprep.subr.mxu0 0.0
        %1408 = vmatpush1.msra.mxu0 0.0
        %1409 = vmatprep.subr.mxu0 0.0
        %1410 = vmatpush1.msra.mxu0 0.0
        %1411 = vmatprep.subr.mxu0 0.0
        %1412 = vmatpush1.msra.mxu0 0.0
        %1413 = vmatprep.subr.mxu0 0.0
        %1414 = vmatpush1.msra.mxu0 0.0
        %1415 = vmatprep.subr.mxu0 0.0
        %1416 = vmatpush1.msra.mxu0 0.0
        %1417 = vmatprep.subr.mxu0 0.0
        %1418 = vmatpush1.msra.mxu0 0.0
        %1419 = vmatprep.subr.mxu0 0.0
        %1420 = vmatpush1.msra.mxu0 0.0
        %1421 = vmatprep.subr.mxu0 0.0
        %1422 = vmatpush1.msra.mxu0 0.0
        %1423 = vmatprep.subr.mxu0 0.0
        %1424 = vmatpush1.msra.mxu0 0.0
        %1425 = vmatprep.subr.mxu0 0.0
        %1426 = vmatpush1.msra.mxu0 0.0
        %1427 = vmatprep.subr.mxu0 0.0
        %1428 = vmatpush1.msra.mxu0 0.0
        %1429 = vmatprep.subr.mxu0 0.0
        %1430 = vmatpush1.msra.mxu0 0.0
        %1431 = vmatprep.subr.mxu0 0.0
        %1432 = vmatpush1.msra.mxu0 0.0
        %1433 = vmatprep.subr.mxu0 0.0
        %1434 = vmatpush1.msra.mxu0 0.0
        %1435 = vmatprep.subr.mxu0 0.0
        %1436 = vmatpush1.msra.mxu0 0.0
        %1437 = vmatprep.subr.mxu0 0.0
        %1438 = vmatpush1.msra.mxu0 0.0
        %1439 = vmatprep.subr.mxu0 0.0
        %1440 = vmatpush1.msra.mxu0 0.0
        %1441 = vmatprep.subr.mxu0 0.0
        %1442 = vmatpush1.msra.mxu0 0.0
        %1443 = vmatprep.subr.mxu0 0.0
        %1444 = vmatpush1.msra.mxu0 0.0
        %1445 = vmatprep.subr.mxu0 0.0
        %1446 = vmatpush1.msra.mxu0 0.0
        %1447 = vmatprep.subr.mxu0 0.0
        %1448 = vmatpush1.msra.mxu0 0.0
        %1449 = vmatprep.subr.mxu0 0.0
        %1450 = vmatpush1.msra.mxu0 0.0
        %1451 = vmatprep.subr.mxu0 0.0
        %1452 = vmatpush1.msra.mxu0 0.0
        %1453 = vmatprep.subr.mxu0 0.0
        %1454 = vmatpush1.msra.mxu0 0.0
        %1455 = vmatprep.subr.mxu0 0.0
        %1456 = vmatpush1.msra.mxu0 0.0
        %1457 = vmatprep.subr.mxu0 0.0
        %1458 = vmatpush1.msra.mxu0 0.0
        %1459 = vmatprep.subr.mxu0 0.0
        %1460 = vmatpush1.msra.mxu0 0.0
        %1461 = vmatprep.subr.mxu0 0.0
        %1462 = vmatpush1.msra.mxu0 0.0
        %1463 = vmatprep.mubr.f32.mxu0 0.0
        %1464 = vmatmul.mubr.f32.gmra.mrb[0].mxu0 %v1397
        %v1465 = vpop.f32.mrb[0].mxu0
        %v1466 = vadd.f32 0.0, %v1465
        %v1467 = vpop.f32.mrb[0].mxu0
        %1468 = vdwg.mxu0
        %v1469 = vadd.f32 %v1396, %v1466
        %v1470 = vxor.u32 %v1469, 2147483648
        %v1471 = vmul.f32 %v1470, 1.442695
        %v1472 = vpow.pop %v1471
        %v1473 = vadd.f32 %v1472, 1.0
        %v1474 = vrcp.pop %v1473
        %v1475 = vmul.f32 1.0, %v1474
        %v1476 = vtanh.pop %v1469
        %v1477 = vmul.f32 %v1475, %v1384
        %1479 = vrot.lane.b32.xlu0 %v1476, 64
        %v1480 = vpop.permute.xlu0 %1479
        %v1482 = vmul.f32 %v1475, %v1480
        %1484 = vrot.lane.b32.xlu0 %v1482, 32
        %v1485 = vpop.permute.xlu0 %1484
        %v1487 = vadd.f32 %v1477, %v1485
        %v1488 = vtanh.pop %v1487
        %1490 = vrot.lane.b32.xlu0 %v1488, 64
        %v1491 = vpop.permute.xlu0 %1490
        %v1493 = vmul.f32 %v1475, %v1491
        %1495 = vrot.lane.b32.xlu0 %v1493, 32
        %v1496 = vpop.permute.xlu0 %1495
        %1498 = vst.msk [vmem:[%s950] sm:$0xff] %vm529, %v1496
        %1499 = vst.msk [vmem:[%s1078] sm:$0xff] %vm529, %v1496
        %1501 = vrot.lane.b32.xlu0 %v1487, 96
        %v1502 = vpop.permute.xlu0 %1501
        %1504 = vst.msk [vmem:[%s1080] sm:$0xff] %vm529, %v1502
        %v1505 = vld [vmem:[#allocation3] sm:$0xff]
        %v1506 = vld [vmem:[#allocation3 + $0x8] sm:$0xff]
        %v1507 = vld [vmem:[#allocation3 + $0x10] sm:$0xff]
        %v1508 = vld [vmem:[#allocation3 + $0x18] sm:$0xff]
        %v1509 = vld [vmem:[%s7] sm:$0xff]
        %v1510 = vld [vmem:[%s7 + $0x8] sm:$0xff]
        %v1511 = vld [vmem:[%s7 + $0x10] sm:$0xff]
        %v1512 = vld [vmem:[%s7 + $0x18] sm:$0xff]
        %v1513 = vld [vmem:[#allocation6] sm:$0x1]
        %v1515 = vlaneseq
        %v1516 = vshrl.u32 %v1515, 7
        %v1517 = vsub.s32 0, %v1516
        %v1518 = vrot.slane %v1513, %v1517
        %v1521 = vsel %vm529, %v1505, 0
        %v1524 = vsel %vm529, %v1506, 0
        %v1527 = vsel %vm529, %v1507, 0
        %v1530 = vsel %vm529, %v1508, 0
        %1532 = vmatprep.subr.mxu0 0.0
        %1533 = vmatpush1.msra.mxu0 %v1509
        %1534 = vmatprep.subr.mxu0 0.0
        %1535 = vmatpush1.msra.mxu0 %v1510
        %1536 = vmatprep.subr.mxu0 0.0
        %1537 = vmatpush1.msra.mxu0 %v1511
        %1538 = vmatprep.subr.mxu0 0.0
        %1539 = vmatpush1.msra.mxu0 %v1512
        %1540 = vmatprep.subr.mxu0 0.0
        %1541 = vmatpush1.msra.mxu0 0.0
        %1542 = vmatprep.subr.mxu0 0.0
        %1543 = vmatpush1.msra.mxu0 0.0
        %1544 = vmatprep.subr.mxu0 0.0
        %1545 = vmatpush1.msra.mxu0 0.0
        %1546 = vmatprep.subr.mxu0 0.0
        %1547 = vmatpush1.msra.mxu0 0.0
        %1548 = vmatprep.subr.mxu0 0.0
        %1549 = vmatpush1.msra.mxu0 0.0
        %1550 = vmatprep.subr.mxu0 0.0
        %1551 = vmatpush1.msra.mxu0 0.0
        %1552 = vmatprep.subr.mxu0 0.0
        %1553 = vmatpush1.msra.mxu0 0.0
        %1554 = vmatprep.subr.mxu0 0.0
        %1555 = vmatpush1.msra.mxu0 0.0
        %1556 = vmatprep.subr.mxu0 0.0
        %1557 = vmatpush1.msra.mxu0 0.0
        %1558 = vmatprep.subr.mxu0 0.0
        %1559 = vmatpush1.msra.mxu0 0.0
        %1560 = vmatprep.subr.mxu0 0.0
        %1561 = vmatpush1.msra.mxu0 0.0
        %1562 = vmatprep.subr.mxu0 0.0
        %1563 = vmatpush1.msra.mxu0 0.0
        %1564 = vmatprep.subr.mxu0 0.0
        %1565 = vmatpush1.msra.mxu0 0.0
        %1566 = vmatprep.subr.mxu0 0.0
        %1567 = vmatpush1.msra.mxu0 0.0
        %1568 = vmatprep.subr.mxu0 0.0
        %1569 = vmatpush1.msra.mxu0 0.0
        %1570 = vmatprep.subr.mxu0 0.0
        %1571 = vmatpush1.msra.mxu0 0.0
        %1572 = vmatprep.subr.mxu0 0.0
        %1573 = vmatpush1.msra.mxu0 0.0
        %1574 = vmatprep.subr.mxu0 0.0
        %1575 = vmatpush1.msra.mxu0 0.0
        %1576 = vmatprep.subr.mxu0 0.0
        %1577 = vmatpush1.msra.mxu0 0.0
        %1578 = vmatprep.subr.mxu0 0.0
        %1579 = vmatpush1.msra.mxu0 0.0
        %1580 = vmatprep.subr.mxu0 0.0
        %1581 = vmatpush1.msra.mxu0 0.0
        %1582 = vmatprep.subr.mxu0 0.0
        %1583 = vmatpush1.msra.mxu0 0.0
        %1584 = vmatprep.subr.mxu0 0.0
        %1585 = vmatpush1.msra.mxu0 0.0
        %1586 = vmatprep.subr.mxu0 0.0
        %1587 = vmatpush1.msra.mxu0 0.0
        %1588 = vmatprep.subr.mxu0 0.0
        %1589 = vmatpush1.msra.mxu0 0.0
        %1590 = vmatprep.subr.mxu0 0.0
        %1591 = vmatpush1.msra.mxu0 0.0
        %1592 = vmatprep.subr.mxu0 0.0
        %1593 = vmatpush1.msra.mxu0 0.0
        %1594 = vmatprep.subr.mxu0 0.0
        %1595 = vmatpush1.msra.mxu0 0.0
        %1596 = vmatprep.mubr.f32.mxu0 0.0
        %1597 = vmatmul.mubr.f32.gmra.mrb[0].mxu0 %v1521
        %v1598 = vpop.f32.mrb[0].mxu0
        %v1599 = vadd.f32 %v1518, %v1598
        %v1600 = vpop.f32.mrb[0].mxu0
        %1601 = vmatprep.mubr.f32.mxu0 0.0
        %1602 = vmatmul.mubr.f32.gmra.mrb[0].mxu0 %v1524
        %v1603 = vpop.f32.mrb[0].mxu0
        %v1604 = vadd.f32 %v1518, %v1603
        %v1605 = vpop.f32.mrb[0].mxu0
        %1606 = vmatprep.mubr.f32.mxu0 0.0
        %1607 = vmatmul.mubr.f32.gmra.mrb[0].mxu0 %v1527
        %v1608 = vpop.f32.mrb[0].mxu0
        %v1609 = vadd.f32 %v1518, %v1608
        %v1610 = vpop.f32.mrb[0].mxu0
        %1611 = vmatprep.mubr.f32.mxu0 0.0
        %1612 = vmatmul.mubr.f32.gmra.mrb[0].mxu0 %v1530
        %v1613 = vpop.f32.mrb[0].mxu0
        %v1614 = vadd.f32 %v1518, %v1613
        %v1615 = vpop.f32.mrb[0].mxu0
        %1616 = vdwg.mxu0
        %1621 = vset.pattern.permute.xlu0 0
        %1622 = vperm.xlu0 %1621, %v1599
        %v1623 = vpop.permute.xlu0 %1622
        %1624 = vset.pattern.permute.xlu0 0
        %1625 = vperm.xlu0 %1624, %v1604
        %v1626 = vpop.permute.xlu0 %1625
        %1627 = vset.pattern.permute.xlu0 0
        %1628 = vperm.xlu0 %1627, %v1609
        %v1629 = vpop.permute.xlu0 %1628
        %1630 = vset.pattern.permute.xlu0 0
        %1631 = vperm.xlu0 %1630, %v1614
        %v1632 = vpop.permute.xlu0 %1631
        %v1633 = vlaneseq
        %v1634 = vand.u32 %v1633, 127
        %v1635 = vlaneseq
        %v1636 = vshrl.u32 %v1635, 7
        %v1637 = vsub.s32 %v1634, %v1636
        %v1638 = vrot.slane %v1623, %v1637
        %v1639 = vlaneseq
        %v1640 = vshrl.u32 %v1639, 7
        %v1641 = vsub.s32 %v1634, %v1640
        %v1642 = vrot.slane %v1626, %v1641
        %v1643 = vlaneseq
        %v1644 = vshrl.u32 %v1643, 7
        %v1645 = vsub.s32 %v1634, %v1644
        %v1646 = vrot.slane %v1629, %v1645
        %v1647 = vlaneseq
        %v1648 = vshrl.u32 %v1647, 7
        %v1649 = vsub.s32 %v1634, %v1648
        %v1650 = vrot.slane %v1632, %v1649
        %vm1651 = vcmask 1041409
        %v1652 = vsel %vm1651, %v1642, %v1638
        %vm1653 = vcmask 1042434
        %v1654 = vsel %vm1653, %v1646, %v1652
        %vm1655 = vcmask 1043459
        %v1656 = vsel %vm1655, %v1650, %v1654
        %vm1658 = vcmask 60416
        %1659 = vst.msk [vmem:[%s396] sm:$0xf] %vm1658, %v1656
        %s1660 = sand.u32 %s232, 1
        %s1661 = scalar_lea.sflag [#allocation9], %s1660
        %s1662 = sand.u32 %s232, 1
        %s1663 = smul.addr %s1662, 4
        %s1664 = scalar_lea.vmem [#allocation15], %s1663
        // Predicated region
        $region77: #{tpu_custom_call.1} parent=55 // pred_check
          %p1665 = pneg %p242
        $region78: #{tpu_custom_call.1} parent=55 // pred_check_branch
          %1667 = sbr.rel (%p1665) target = $region80
        $region79: #{tpu_custom_call.1} parent=55 // pred_region
          %s1669 = ssub.s32 64, 64
          %1670 = vsyncadd %s1661, %s1669
          %s1671 = smul.addr %s30, 64
          %s1672 = scalar_lea.hbm %s9, %s1671
          %s1674 = sshll.u32 %s1664, 4
          %s1675 = int_to_ptr.vmem [resolvable:$true] %s1674
          %1677 = dma.vmem_to_hbm [thread:$0]  %s1675, 64, %s1672, %s1661
        $region80: #{tpu_custom_call.1} parent=55 // pred_fallthru
          _
      $region56: #{tpu_custom_call.1} parent=5 // pred_fallthru
        _
      %p1678 = scmp.le.s32.totalorder 2, %s25
      // Predicated region
      $region81: #{tpu_custom_call.1} parent=5 // pred_check
        %p1679 = pneg %p1678
      $region82: #{tpu_custom_call.1} parent=5 // pred_check_branch
        %1681 = sbr.rel (%p1679) target = $region84
      $region83: #{tpu_custom_call.1} parent=5 // pred_region
        %s1682 = ssub.s32 %s25, 2
        // Predicated region
        $region85: #{tpu_custom_call.1} parent=83 // pred_check
          %p1683 = pneg %p248
        $region86: #{tpu_custom_call.1} parent=83 // pred_check_branch
          %1685 = sbr.rel (%p1683) target = $region88
        $region87: #{tpu_custom_call.1} parent=83 // pred_region
          %s1686 = sand.u32 %s233, 1
          %s1687 = scalar_lea.sflag [#allocation9], %s1686
          %s1688 = sand.u32 %s233, 1
          %s1689 = smul.addr %s1688, 4
          %s1690 = scalar_lea.vmem [#allocation15], %s1689
          %1691 = dma.done %s1687, 64
        $region88: #{tpu_custom_call.1} parent=83 // pred_fallthru
          _
      $region84: #{tpu_custom_call.1} parent=5 // pred_fallthru
        _
    $region6: #{tpu_custom_call.1} parent=1 // loop_footer
      %s29 = sadd.s32 1, %s25
    $region7: #{tpu_custom_call.1} parent=1 // loop_footer_branch
      %24 = sbr.rel target = $region3
    $region8: #{tpu_custom_call.1} parent=1 // loop_exit
      _
    %1692 = vsyncpa [#allocation8], 1
    %s1693 = scalar_lea.sflag [#allocation8], 1
    %1694 = vsyncpa %s1693, 1
    %1695 = vsyncpa [#allocation11], 1
    %1696 = vsyncpa [#allocation14], 1
    %1697 = vsyncpa [#allocation9], 1
    %s1698 = scalar_lea.sflag [#allocation9], 1
    %1699 = vsyncpa %s1698, 1

</llo_original>
